<compile_context>
chip_gen: v7x
topology: tpu7x:2x2x1
jax: 0.10.0
libtpu: 0.0.40
codegen_flags: <defaults>
</compile_context>

<pallas_src>
import functools

import jax
import jax.numpy as jnp
from jax.experimental import pallas as pl
from jax.experimental.pallas import tpu as pltpu


# ----------------------------------------------------------------------------
# Kernel
# ----------------------------------------------------------------------------
def _fc_kernel(n_hidden, *refs):
    # refs = [x_ref, (w_ref, b_ref) * n_hidden, wf_ref, bf_ref, out_ref]
    x_ref = refs[0]
    out_ref = refs[-1]
    param_refs = refs[1:-1]

    h = x_ref[...]  # (TILE_B, IN) float32

    # hidden layers: Linear + ReLU (bf16 MXU matmul, f32 accumulate, VPU max)
    for i in range(n_hidden):
        w_ref = param_refs[2 * i]       # (IN_pad, W_pad) bf16
        b_ref = param_refs[2 * i + 1]   # (1, W_pad) f32
        acc = jnp.dot(h.astype(jnp.bfloat16), w_ref[...],
                      preferred_element_type=jnp.float32)
        h = jnp.maximum(acc + b_ref[...], 0.0)

    # final layer: Linear (padded output columns carry a -1e9 bias)
    wf_ref = param_refs[2 * n_hidden]   # (W_pad, OUT_pad) bf16
    bf_ref = param_refs[2 * n_hidden + 1]  # (1, OUT_pad) f32
    logits = jnp.dot(h.astype(jnp.bfloat16), wf_ref[...],
                     preferred_element_type=jnp.float32) + bf_ref[...]

    # output activation: numerically-stable softmax over the (padded) last dim
    m = jnp.max(logits, axis=-1, keepdims=True)
    e = jnp.exp(logits - m)
    denom = jnp.sum(e, axis=-1, keepdims=True)
    out_ref[...] = e * pl.reciprocal(denom, approx=False)


# ----------------------------------------------------------------------------
# Wrapper
# ----------------------------------------------------------------------------
def _round_up(x, m):
    return ((x + m - 1) // m) * m


def _pad_axis(a, target, axis, value=0.0):
    pad = target - a.shape[axis]
    if pad <= 0:
        return a
    widths = [(0, 0)] * a.ndim
    widths[axis] = (0, pad)
    return jnp.pad(a, widths, constant_values=value)


def fc_network_forward(x, hidden_params, final_params, *, max_tile_b=256):
    """x: (B, C, H, W) float32. hidden_params: list of (W[in,out], b[1,out]).
    final_params: (Wf[in,out], bf[1,out]). Returns softmax probs (B, out_dim)."""
    batch = x.shape[0]
    input_size = 1
    for d in x.shape[1:]:
        input_size *= d
    x2d = x.reshape(batch, input_size).astype(jnp.float32)

    n_hidden = len(hidden_params)
    width = hidden_params[0][0].shape[1]
    out_dim = final_params[0].shape[1]

    w_pad = _round_up(width, 128)      # 200 -> 256
    out_pad = _round_up(out_dim, 128)  # 10  -> 128

    # ---- pad + cast parameters (weights bf16, biases f32) -------------------
    flat_params = []
    for li, (w, b) in enumerate(hidden_params):
        if li > 0:
            w = _pad_axis(w, w_pad, axis=0)              # zero rows (dead acts)
        w = _pad_axis(w, w_pad, axis=1)                  # zero cols
        b = _pad_axis(b, w_pad, axis=1)                  # zero bias -> ReLU 0
        flat_params.extend([w.astype(jnp.bfloat16), b.astype(jnp.float32)])

    wf, bf = final_params
    wf = _pad_axis(_pad_axis(wf, w_pad, axis=0), out_pad, axis=1)
    bf = _pad_axis(bf, out_pad, axis=1, value=-1e9)      # padded logits -> -1e9
    flat_params.extend([wf.astype(jnp.bfloat16), bf.astype(jnp.float32)])

    # ---- batch padding / tiling ---------------------------------------------
    b_pad = _round_up(batch, 8)
    if b_pad <= max_tile_b:
        tile_b = b_pad                  # single grid step: no tiling overhead
    else:
        tile_b = max_tile_b
        b_pad = _round_up(b_pad, tile_b)
    x2d = _pad_axis(x2d, b_pad, axis=0)
    grid = (b_pad // tile_b,)

    # ---- specs ---------------------------------------------------------------
    x_spec = pl.BlockSpec((tile_b, input_size), lambda i: (i, 0))
    # Weights/biases: whole array resident in VMEM, constant index_map so the
    # pipeline never re-fetches them across batch tiles.
    param_specs = [pl.BlockSpec(p.shape, lambda i: (0, 0)) for p in flat_params]
    out_spec = pl.BlockSpec((tile_b, out_pad), lambda i: (i, 0))

    param_bytes = sum(p.size * p.dtype.itemsize for p in flat_params)
    flops = 2 * b_pad * (input_size * w_pad
                         + max(n_hidden - 1, 0) * w_pad * w_pad
                         + w_pad * out_pad)
    cost = pl.CostEstimate(
        flops=flops,
        transcendentals=b_pad * out_pad,
        bytes_accessed=param_bytes + b_pad * (input_size + out_pad) * 4,
    )

    kernel = functools.partial(_fc_kernel, n_hidden)

    out_padded = pl.pallas_call(
        kernel,
        out_shape=jax.ShapeDtypeStruct((b_pad, out_pad), jnp.float32),
        grid=grid,
        in_specs=[x_spec] + param_specs,
        out_specs=out_spec,
        compiler_params=pltpu.CompilerParams(
            dimension_semantics=("parallel",),
            vmem_limit_bytes=32 * 1024 * 1024,
        ),
        cost_estimate=cost,
    )(x2d, *flat_params)

    return out_padded[:batch, :out_dim]


# ----------------------------------------------------------------------------
# Param init (mimics torch.nn.Linear default: U(-1/sqrt(fan_in), 1/sqrt(fan_in)))
# Weights stored (in_features, out_features); biases (1, out_features).
# ----------------------------------------------------------------------------
def init_params(key, input_size, width, depth, output_size):
    hidden_params = []
    fan_ins_outs = [(input_size, width)] + [(width, width)] * (depth - 2)
    keys = jax.random.split(key, len(fan_ins_outs) + 1)
    for (fan_in, fan_out), k in zip(fan_ins_outs, keys[:-1]):
        kw, kb = jax.random.split(k)
        bound = 1.0 / jnp.sqrt(float(fan_in))
        w = jax.random.uniform(kw, (fan_in, fan_out), jnp.float32, -bound, bound)
        b = jax.random.uniform(kb, (1, fan_out), jnp.float32, -bound, bound)
        hidden_params.append((w, b))
    kw, kb = jax.random.split(keys[-1])
    bound = 1.0 / jnp.sqrt(float(width))
    wf = jax.random.uniform(kw, (width, output_size), jnp.float32, -bound, bound)
    bf = jax.random.uniform(kb, (1, output_size), jnp.float32, -bound, bound)
    return hidden_params, (wf, bf)


# ----------------------------------------------------------------------------
# Pure-JAX reference emulating the kernel's precision (bf16 operands,
# f32 accumulation) so the comparison isolates kernel correctness.
# ----------------------------------------------------------------------------
def reference_forward(x, hidden_params, final_params):
    batch = x.shape[0]
    h = x.reshape(batch, -1).astype(jnp.float32)

    def bdot(a, w):
        return jnp.dot(a.astype(jnp.bfloat16).astype(jnp.float32),
                       w.astype(jnp.bfloat16).astype(jnp.float32))

    for w, b in hidden_params:
        h = jnp.maximum(bdot(h, w) + b, 0.0)
    wf, bf = final_params
    logits = bdot(h, wf) + bf
    return jax.nn.softmax(logits, axis=-1)


if __name__ == "__main__":
    key = jax.random.PRNGKey(0)

    # Module defaults: input_dimensions=(1, 28, 28), width=200, depth=5, out=(10,)
    batch = 2
    input_dims = (1, 28, 28)
    width = 200
    depth = 5
    output_size = 10
    input_size = 1
    for d in input_dims:
        input_size *= d

    kx, kp = jax.random.split(key)
    x = jax.random.normal(kx, (batch,) + input_dims, jnp.float32)
    hidden_params, final_params = init_params(kp, input_size, width, depth, output_size)

    out = fc_network_forward(x, hidden_params, final_params)
    out = jax.block_until_ready(out)

    ref = reference_forward(x, hidden_params, final_params)
    assert out.shape == (batch, output_size), out.shape
    assert jnp.allclose(out, ref, atol=1e-3, rtol=1e-3), "mismatch vs precision-matched reference"
    assert jnp.allclose(jnp.sum(out, axis=-1), 1.0, atol=1e-5), "softmax rows must sum to 1"

    print("KERNEL_OK")
</pallas_src>

<mosaic_0001>
module attributes {stable_mosaic.version = 11 : i64} {
  func.func @_fc_kernel(%arg0: i32, %arg1: memref<8x784xf32, #tpu.memory_space<vmem>>, %arg2: memref<784x256xbf16, #tpu.memory_space<vmem>>, %arg3: memref<1x256xf32, #tpu.memory_space<vmem>>, %arg4: memref<256x256xbf16, #tpu.memory_space<vmem>>, %arg5: memref<1x256xf32, #tpu.memory_space<vmem>>, %arg6: memref<256x256xbf16, #tpu.memory_space<vmem>>, %arg7: memref<1x256xf32, #tpu.memory_space<vmem>>, %arg8: memref<256x256xbf16, #tpu.memory_space<vmem>>, %arg9: memref<1x256xf32, #tpu.memory_space<vmem>>, %arg10: memref<256x128xbf16, #tpu.memory_space<vmem>>, %arg11: memref<1x128xf32, #tpu.memory_space<vmem>>, %arg12: memref<8x128xf32, #tpu.memory_space<vmem>>) attributes {dimension_semantics = [#tpu.dimension_semantics<parallel>], iteration_bounds = array<i64: 1>, scalar_prefetch = 0 : i64, scratch_operands = 0 : i64, tpu.core_type = #tpu.core_type<tc>, window_params = [{transform_indices = @transform_0, window_bounds = array<i64: 8, 784>}, {pipeline_mode = #tpu.pipeline_mode<synchronous>, transform_indices = @transform_1, window_bounds = array<i64: 784, 256>}, {pipeline_mode = #tpu.pipeline_mode<synchronous>, transform_indices = @transform_2, window_bounds = array<i64: 1, 256>}, {pipeline_mode = #tpu.pipeline_mode<synchronous>, transform_indices = @transform_3, window_bounds = array<i64: 256, 256>}, {pipeline_mode = #tpu.pipeline_mode<synchronous>, transform_indices = @transform_4, window_bounds = array<i64: 1, 256>}, {pipeline_mode = #tpu.pipeline_mode<synchronous>, transform_indices = @transform_5, window_bounds = array<i64: 256, 256>}, {pipeline_mode = #tpu.pipeline_mode<synchronous>, transform_indices = @transform_6, window_bounds = array<i64: 1, 256>}, {pipeline_mode = #tpu.pipeline_mode<synchronous>, transform_indices = @transform_7, window_bounds = array<i64: 256, 256>}, {pipeline_mode = #tpu.pipeline_mode<synchronous>, transform_indices = @transform_8, window_bounds = array<i64: 1, 256>}, {pipeline_mode = #tpu.pipeline_mode<synchronous>, transform_indices = @transform_9, window_bounds = array<i64: 256, 128>}, {pipeline_mode = #tpu.pipeline_mode<synchronous>, transform_indices = @transform_10, window_bounds = array<i64: 1, 128>}, {transform_indices = @transform_11, window_bounds = array<i64: 8, 128>}]} {
    %c0 = arith.constant 0 : index
    %c0_0 = arith.constant 0 : index
    %0 = vector.load %arg1[%c0, %c0_0] : memref<8x784xf32, #tpu.memory_space<vmem>>, vector<8x784xf32>
    %1 = arith.truncf %0 : vector<8x784xf32> to vector<8x784xbf16>
    %c0_1 = arith.constant 0 : index
    %c0_2 = arith.constant 0 : index
    %2 = vector.load %arg2[%c0_1, %c0_2] : memref<784x256xbf16, #tpu.memory_space<vmem>>, vector<784x256xbf16>
    %cst = arith.constant dense<0.000000e+00> : vector<8x256xf32>
    %3 = tpu.matmul %1, %2, %cst {dimension_numbers = #tpu.dot_dimension_numbers<[1], [0], [0], [1], [0, 0, 1, 1], [], []>} : vector<8x784xbf16>, vector<784x256xbf16>, vector<8x256xf32> -> vector<8x256xf32>
    %c0_3 = arith.constant 0 : index
    %c0_4 = arith.constant 0 : index
    %4 = vector.load %arg3[%c0_3, %c0_4] : memref<1x256xf32, #tpu.memory_space<vmem>>, vector<1x256xf32>
    %5 = vector.broadcast %4 : vector<1x256xf32> to vector<8x256xf32>
    %6 = arith.addf %3, %5 : vector<8x256xf32>
    %cst_5 = arith.constant 0.000000e+00 : f32
    %7 = vector.broadcast %cst_5 : f32 to vector<8x256xf32>
    %8 = arith.maximumf %6, %7 : vector<8x256xf32>
    %9 = arith.truncf %8 : vector<8x256xf32> to vector<8x256xbf16>
    %c0_6 = arith.constant 0 : index
    %c0_7 = arith.constant 0 : index
    %10 = vector.load %arg4[%c0_6, %c0_7] : memref<256x256xbf16, #tpu.memory_space<vmem>>, vector<256x256xbf16>
    %cst_8 = arith.constant dense<0.000000e+00> : vector<8x256xf32>
    %11 = tpu.matmul %9, %10, %cst_8 {dimension_numbers = #tpu.dot_dimension_numbers<[1], [0], [0], [1], [0, 0, 1, 1], [], []>} : vector<8x256xbf16>, vector<256x256xbf16>, vector<8x256xf32> -> vector<8x256xf32>
    %c0_9 = arith.constant 0 : index
    %c0_10 = arith.constant 0 : index
    %12 = vector.load %arg5[%c0_9, %c0_10] : memref<1x256xf32, #tpu.memory_space<vmem>>, vector<1x256xf32>
    %13 = vector.broadcast %12 : vector<1x256xf32> to vector<8x256xf32>
    %14 = arith.addf %11, %13 : vector<8x256xf32>
    %cst_11 = arith.constant 0.000000e+00 : f32
    %15 = vector.broadcast %cst_11 : f32 to vector<8x256xf32>
    %16 = arith.maximumf %14, %15 : vector<8x256xf32>
    %17 = arith.truncf %16 : vector<8x256xf32> to vector<8x256xbf16>
    %c0_12 = arith.constant 0 : index
    %c0_13 = arith.constant 0 : index
    %18 = vector.load %arg6[%c0_12, %c0_13] : memref<256x256xbf16, #tpu.memory_space<vmem>>, vector<256x256xbf16>
    %cst_14 = arith.constant dense<0.000000e+00> : vector<8x256xf32>
    %19 = tpu.matmul %17, %18, %cst_14 {dimension_numbers = #tpu.dot_dimension_numbers<[1], [0], [0], [1], [0, 0, 1, 1], [], []>} : vector<8x256xbf16>, vector<256x256xbf16>, vector<8x256xf32> -> vector<8x256xf32>
    %c0_15 = arith.constant 0 : index
    %c0_16 = arith.constant 0 : index
    %20 = vector.load %arg7[%c0_15, %c0_16] : memref<1x256xf32, #tpu.memory_space<vmem>>, vector<1x256xf32>
    %21 = vector.broadcast %20 : vector<1x256xf32> to vector<8x256xf32>
    %22 = arith.addf %19, %21 : vector<8x256xf32>
    %cst_17 = arith.constant 0.000000e+00 : f32
    %23 = vector.broadcast %cst_17 : f32 to vector<8x256xf32>
    %24 = arith.maximumf %22, %23 : vector<8x256xf32>
    %25 = arith.truncf %24 : vector<8x256xf32> to vector<8x256xbf16>
    %c0_18 = arith.constant 0 : index
    %c0_19 = arith.constant 0 : index
    %26 = vector.load %arg8[%c0_18, %c0_19] : memref<256x256xbf16, #tpu.memory_space<vmem>>, vector<256x256xbf16>
    %cst_20 = arith.constant dense<0.000000e+00> : vector<8x256xf32>
    %27 = tpu.matmul %25, %26, %cst_20 {dimension_numbers = #tpu.dot_dimension_numbers<[1], [0], [0], [1], [0, 0, 1, 1], [], []>} : vector<8x256xbf16>, vector<256x256xbf16>, vector<8x256xf32> -> vector<8x256xf32>
    %c0_21 = arith.constant 0 : index
    %c0_22 = arith.constant 0 : index
    %28 = vector.load %arg9[%c0_21, %c0_22] : memref<1x256xf32, #tpu.memory_space<vmem>>, vector<1x256xf32>
    %29 = vector.broadcast %28 : vector<1x256xf32> to vector<8x256xf32>
    %30 = arith.addf %27, %29 : vector<8x256xf32>
    %cst_23 = arith.constant 0.000000e+00 : f32
    %31 = vector.broadcast %cst_23 : f32 to vector<8x256xf32>
    %32 = arith.maximumf %30, %31 : vector<8x256xf32>
    %33 = arith.truncf %32 : vector<8x256xf32> to vector<8x256xbf16>
    %c0_24 = arith.constant 0 : index
    %c0_25 = arith.constant 0 : index
    %34 = vector.load %arg10[%c0_24, %c0_25] : memref<256x128xbf16, #tpu.memory_space<vmem>>, vector<256x128xbf16>
    %cst_26 = arith.constant dense<0.000000e+00> : vector<8x128xf32>
    %35 = tpu.matmul %33, %34, %cst_26 {dimension_numbers = #tpu.dot_dimension_numbers<[1], [0], [0], [1], [0, 0, 1, 1], [], []>} : vector<8x256xbf16>, vector<256x128xbf16>, vector<8x128xf32> -> vector<8x128xf32>
    %c0_27 = arith.constant 0 : index
    %c0_28 = arith.constant 0 : index
    %36 = vector.load %arg11[%c0_27, %c0_28] : memref<1x128xf32, #tpu.memory_space<vmem>>, vector<1x128xf32>
    %37 = vector.broadcast %36 : vector<1x128xf32> to vector<8x128xf32>
    %38 = arith.addf %35, %37 : vector<8x128xf32>
    %cst_29 = arith.constant dense<0xFF800000> : vector<8xf32>
    %39 = vector.multi_reduction <maximumf>, %38, %cst_29 [1] : vector<8x128xf32> to vector<8xf32>
    %40 = vector.shape_cast %39 : vector<8xf32> to vector<8x1xf32>
    %41 = vector.broadcast %40 : vector<8x1xf32> to vector<8x128xf32>
    %42 = arith.subf %38, %41 : vector<8x128xf32>
    %43 = math.exp %42 : vector<8x128xf32>
    %cst_30 = arith.constant dense<0.000000e+00> : vector<8xf32>
    %44 = vector.multi_reduction <add>, %43, %cst_30 [1] : vector<8x128xf32> to vector<8xf32>
    %45 = vector.shape_cast %44 : vector<8xf32> to vector<8x1xf32>
    %46 = tpu.reciprocal %45 : vector<8x1xf32> -> vector<8x1xf32>
    %47 = vector.broadcast %46 : vector<8x1xf32> to vector<8x128xf32>
    %48 = arith.mulf %43, %47 : vector<8x128xf32>
    %c0_31 = arith.constant 0 : index
    %c0_32 = arith.constant 0 : index
    %49 = vector.load %arg12[%c0_31, %c0_32] : memref<8x128xf32, #tpu.memory_space<vmem>>, vector<8x128xf32>
    tpu.vector_store %arg12[%c0_31, %c0_32], %48 {strides = array<i32>} : memref<8x128xf32, #tpu.memory_space<vmem>>, vector<8x128xf32>,
    return
  }
  func.func @transform_0(%arg0: i32) -> (i32, i32) {
    %c0_i32 = arith.constant 0 : i32
    %c0_i32_0 = arith.constant 0 : i32
    return %arg0, %c0_i32 : i32, i32
  }
  func.func @transform_1(%arg0: i32) -> (i32, i32) {
    %c0_i32 = arith.constant 0 : i32
    %c0_i32_0 = arith.constant 0 : i32
    %c0_i32_1 = arith.constant 0 : i32
    return %c0_i32, %c0_i32_0 : i32, i32
  }
  func.func @transform_2(%arg0: i32) -> (i32, i32) {
    %c0_i32 = arith.constant 0 : i32
    %c0_i32_0 = arith.constant 0 : i32
    %c0_i32_1 = arith.constant 0 : i32
    return %c0_i32, %c0_i32_0 : i32, i32
  }
  func.func @transform_3(%arg0: i32) -> (i32, i32) {
    %c0_i32 = arith.constant 0 : i32
    %c0_i32_0 = arith.constant 0 : i32
    %c0_i32_1 = arith.constant 0 : i32
    return %c0_i32, %c0_i32_0 : i32, i32
  }
  func.func @transform_4(%arg0: i32) -> (i32, i32) {
    %c0_i32 = arith.constant 0 : i32
    %c0_i32_0 = arith.constant 0 : i32
    %c0_i32_1 = arith.constant 0 : i32
    return %c0_i32, %c0_i32_0 : i32, i32
  }
  func.func @transform_5(%arg0: i32) -> (i32, i32) {
    %c0_i32 = arith.constant 0 : i32
    %c0_i32_0 = arith.constant 0 : i32
    %c0_i32_1 = arith.constant 0 : i32
    return %c0_i32, %c0_i32_0 : i32, i32
  }
  func.func @transform_6(%arg0: i32) -> (i32, i32) {
    %c0_i32 = arith.constant 0 : i32
    %c0_i32_0 = arith.constant 0 : i32
    %c0_i32_1 = arith.constant 0 : i32
    return %c0_i32, %c0_i32_0 : i32, i32
  }
  func.func @transform_7(%arg0: i32) -> (i32, i32) {
    %c0_i32 = arith.constant 0 : i32
    %c0_i32_0 = arith.constant 0 : i32
    %c0_i32_1 = arith.constant 0 : i32
    return %c0_i32, %c0_i32_0 : i32, i32
  }
  func.func @transform_8(%arg0: i32) -> (i32, i32) {
    %c0_i32 = arith.constant 0 : i32
    %c0_i32_0 = arith.constant 0 : i32
    %c0_i32_1 = arith.constant 0 : i32
    return %c0_i32, %c0_i32_0 : i32, i32
  }
  func.func @transform_9(%arg0: i32) -> (i32, i32) {
    %c0_i32 = arith.constant 0 : i32
    %c0_i32_0 = arith.constant 0 : i32
    %c0_i32_1 = arith.constant 0 : i32
    return %c0_i32, %c0_i32_0 : i32, i32
  }
  func.func @transform_10(%arg0: i32) -> (i32, i32) {
    %c0_i32 = arith.constant 0 : i32
    %c0_i32_0 = arith.constant 0 : i32
    %c0_i32_1 = arith.constant 0 : i32
    return %c0_i32, %c0_i32_0 : i32, i32
  }
  func.func @transform_11(%arg0: i32) -> (i32, i32) {
    %c0_i32 = arith.constant 0 : i32
    %c0_i32_0 = arith.constant 0 : i32
    return %arg0, %c0_i32 : i32, i32
  }
}

</mosaic_0001>

<llo_original>
// kernel: tpu_custom_call.1
$region0: #{tpu_custom_call.1}
  #allocation0 [shape = 'u32[]', space=smem, size = 0x4, offset = 0x4, fixed_abs, tag = 'smem constant byte address 0x4 - core index']
  #allocation1 [shape = 'u32[144,128]{1,0:T(1,128)}', space=vmem, size = 0x12000, scoped, tag = 'internal scratch']
  %s0 = inlined_call_operand.hbm [shape: f32[8,784], index: 0, kind: input, shape index: {}]
  %s1 = inlined_call_operand.hbm [shape: bf16[784,256], index: 1, kind: input, shape index: {}]
  %s2 = inlined_call_operand.vmem [shape: f32[1,256], index: 2, kind: input, shape index: {}]
  %s3 = inlined_call_operand.hbm [shape: bf16[256,256], index: 3, kind: input, shape index: {}]
  %s4 = inlined_call_operand.vmem [shape: f32[1,256], index: 4, kind: input, shape index: {}]
  %s5 = inlined_call_operand.hbm [shape: bf16[256,256], index: 5, kind: input, shape index: {}]
  %s6 = inlined_call_operand.vmem [shape: f32[1,256], index: 6, kind: input, shape index: {}]
  %s7 = inlined_call_operand.hbm [shape: bf16[256,256], index: 7, kind: input, shape index: {}]
  %s8 = inlined_call_operand.vmem [shape: f32[1,256], index: 8, kind: input, shape index: {}]
  %s9 = inlined_call_operand.hbm [shape: bf16[256,128], index: 9, kind: input, shape index: {}]
  %s10 = inlined_call_operand.vmem [shape: f32[1,128], index: 10, kind: input, shape index: {}]
  %s11 = inlined_call_operand.hbm [shape: f32[8,128], index: 11, kind: output, shape index: {}]
  %s12 = sld [smem:[#allocation0]]
  $region78: #{tpu_custom_call.1} parent=0
    _
  %s14 = ssub.s32 1, %s12
  %s15 = scalar_select 0, %s14, %s12
  $region1: #{tpu_custom_call.1} parent=0
    #allocation2 [shape = 'u8[28672]{0}', space=vmem, size = 0x7000, scoped, tag = 'input window, operand 0, single buffered']
    #allocation3 [shape = 's32[1]{0}', space=sflag, size = 0x4, scoped, tag = 'scoped memory for tpu_custom_call.1']
    #allocation4 [shape = 's32[1]{0}', space=sflag, size = 0x4, scoped, tag = 'scoped memory for tpu_custom_call.1']
    #allocation5 [shape = 'u8[401408]{0}', space=vmem, size = 0x62000, scoped, tag = 'input window, operand 1, single buffered']
    #allocation6 [shape = 's32[1]{0}', space=sflag, size = 0x4, scoped, tag = 'scoped memory for tpu_custom_call.1']
    #allocation7 [shape = 'u8[131072]{0}', space=vmem, size = 0x20000, scoped, tag = 'input window, operand 3, single buffered']
    #allocation8 [shape = 'u8[131072]{0}', space=vmem, size = 0x20000, scoped, tag = 'input window, operand 5, single buffered']
    #allocation9 [shape = 's32[1]{0}', space=sflag, size = 0x4, scoped, tag = 'scoped memory for tpu_custom_call.1']
    #allocation10 [shape = 'u8[131072]{0}', space=vmem, size = 0x20000, scoped, tag = 'input window, operand 7, single buffered']
    #allocation11 [shape = 'u8[65536]{0}', space=vmem, size = 0x10000, scoped, tag = 'input window, operand 9, single buffered']
    #allocation12 [shape = 's32[1]{0}', space=sflag, size = 0x4, scoped, tag = 'scoped memory for tpu_custom_call.1']
    #allocation13 [shape = 'u8[4096]{0}', space=vmem, size = 0x1000, scoped, tag = 'output window, operand 0, single buffered']
    %16 = vsyncpa [#allocation3], 0
    %17 = vsyncpa [#allocation6], 0
    %18 = vsyncpa [#allocation9], 0
    %19 = vsyncpa [#allocation12], 0
    %20 = vsyncpa [#allocation4], 0
    // Predicated region
    $region2: #{tpu_custom_call.1} parent=1 // pred_check
      _
    $region3: #{tpu_custom_call.1} parent=1 // pred_check_branch
      %22 = sbr.rel (0) target = $region5
    $region4: #{tpu_custom_call.1} parent=1 // pred_region
      %s24 = ssub.s32 896, 896
      %25 = vsyncadd [#allocation3], %s24
      %s27 = sshll.u32 [#allocation2], 4
      %s28 = int_to_ptr.vmem [resolvable:$true] %s27
      %30 = dma.hbm_to_vmem [thread:$0]  %s0, 896, %s28, [#allocation3]
    $region5: #{tpu_custom_call.1} parent=1 // pred_fallthru
      _
    // Predicated region
    $region6: #{tpu_custom_call.1} parent=1 // pred_check
      _
    $region7: #{tpu_custom_call.1} parent=1 // pred_check_branch
      %32 = sbr.rel (0) target = $region9
    $region8: #{tpu_custom_call.1} parent=1 // pred_region
      %s34 = ssub.s32 12544, 12544
      %35 = vsyncadd [#allocation6], %s34
      %s36 = sshll.u32 [#allocation5], 4
      %s37 = int_to_ptr.vmem [resolvable:$true] %s36
      %42 = dma.hbm_to_vmem [thread:$0]  %s1, 12544, %s37, [#allocation6], 128, 128, 8
    $region9: #{tpu_custom_call.1} parent=1 // pred_fallthru
      _
    // Predicated region
    $region10: #{tpu_custom_call.1} parent=1 // pred_check
      _
    $region11: #{tpu_custom_call.1} parent=1 // pred_check_branch
      %44 = sbr.rel (0) target = $region13
    $region12: #{tpu_custom_call.1} parent=1 // pred_region
      _
    $region13: #{tpu_custom_call.1} parent=1 // pred_fallthru
      _
    // Predicated region
    $region14: #{tpu_custom_call.1} parent=1 // pred_check
      _
    $region15: #{tpu_custom_call.1} parent=1 // pred_check_branch
      %46 = sbr.rel (0) target = $region17
    $region16: #{tpu_custom_call.1} parent=1 // pred_region
      %s48 = ssub.s32 4096, 4096
      %49 = vsyncadd [#allocation6], %s48
      %s50 = sshll.u32 [#allocation7], 4
      %s51 = int_to_ptr.vmem [resolvable:$true] %s50
      %56 = dma.hbm_to_vmem [thread:$0]  %s3, 4096, %s51, [#allocation6], 128, 128, 8
    $region17: #{tpu_custom_call.1} parent=1 // pred_fallthru
      _
    // Predicated region
    $region18: #{tpu_custom_call.1} parent=1 // pred_check
      _
    $region19: #{tpu_custom_call.1} parent=1 // pred_check_branch
      %58 = sbr.rel (0) target = $region21
    $region20: #{tpu_custom_call.1} parent=1 // pred_region
      _
    $region21: #{tpu_custom_call.1} parent=1 // pred_fallthru
      _
    // Predicated region
    $region22: #{tpu_custom_call.1} parent=1 // pred_check
      _
    $region23: #{tpu_custom_call.1} parent=1 // pred_check_branch
      %60 = sbr.rel (0) target = $region25
    $region24: #{tpu_custom_call.1} parent=1 // pred_region
      %s62 = ssub.s32 4096, 4096
      %63 = vsyncadd [#allocation9], %s62
      %s64 = sshll.u32 [#allocation8], 4
      %s65 = int_to_ptr.vmem [resolvable:$true] %s64
      %70 = dma.hbm_to_vmem [thread:$0]  %s5, 4096, %s65, [#allocation9], 128, 128, 8
    $region25: #{tpu_custom_call.1} parent=1 // pred_fallthru
      _
    // Predicated region
    $region26: #{tpu_custom_call.1} parent=1 // pred_check
      _
    $region27: #{tpu_custom_call.1} parent=1 // pred_check_branch
      %72 = sbr.rel (0) target = $region29
    $region28: #{tpu_custom_call.1} parent=1 // pred_region
      _
    $region29: #{tpu_custom_call.1} parent=1 // pred_fallthru
      _
    // Predicated region
    $region30: #{tpu_custom_call.1} parent=1 // pred_check
      _
    $region31: #{tpu_custom_call.1} parent=1 // pred_check_branch
      %74 = sbr.rel (0) target = $region33
    $region32: #{tpu_custom_call.1} parent=1 // pred_region
      %s76 = ssub.s32 4096, 4096
      %77 = vsyncadd [#allocation9], %s76
      %s78 = sshll.u32 [#allocation10], 4
      %s79 = int_to_ptr.vmem [resolvable:$true] %s78
      %84 = dma.hbm_to_vmem [thread:$0]  %s7, 4096, %s79, [#allocation9], 128, 128, 8
    $region33: #{tpu_custom_call.1} parent=1 // pred_fallthru
      _
    // Predicated region
    $region34: #{tpu_custom_call.1} parent=1 // pred_check
      _
    $region35: #{tpu_custom_call.1} parent=1 // pred_check_branch
      %86 = sbr.rel (0) target = $region37
    $region36: #{tpu_custom_call.1} parent=1 // pred_region
      _
    $region37: #{tpu_custom_call.1} parent=1 // pred_fallthru
      _
    // Predicated region
    $region38: #{tpu_custom_call.1} parent=1 // pred_check
      _
    $region39: #{tpu_custom_call.1} parent=1 // pred_check_branch
      %88 = sbr.rel (0) target = $region41
    $region40: #{tpu_custom_call.1} parent=1 // pred_region
      %s90 = ssub.s32 2048, 2048
      %91 = vsyncadd [#allocation12], %s90
      %s92 = sshll.u32 [#allocation11], 4
      %s93 = int_to_ptr.vmem [resolvable:$true] %s92
      %98 = dma.hbm_to_vmem [thread:$0]  %s9, 2048, %s93, [#allocation12], 64, 64, 4
    $region41: #{tpu_custom_call.1} parent=1 // pred_fallthru
      _
    // Predicated region
    $region42: #{tpu_custom_call.1} parent=1 // pred_check
      _
    $region43: #{tpu_custom_call.1} parent=1 // pred_check_branch
      %100 = sbr.rel (0) target = $region45
    $region44: #{tpu_custom_call.1} parent=1 // pred_region
      _
    $region45: #{tpu_custom_call.1} parent=1 // pred_fallthru
      _
    // Predicated region
    $region46: #{tpu_custom_call.1} parent=1 // pred_check
      _
    $region47: #{tpu_custom_call.1} parent=1 // pred_check_branch
      %102 = sbr.rel (0) target = $region49
    $region48: #{tpu_custom_call.1} parent=1 // pred_region
      %103 = dma.done [#allocation3], 896
    $region49: #{tpu_custom_call.1} parent=1 // pred_fallthru
      _
    // Predicated region
    $region50: #{tpu_custom_call.1} parent=1 // pred_check
      _
    $region51: #{tpu_custom_call.1} parent=1 // pred_check_branch
      %105 = sbr.rel (0) target = $region53
    $region52: #{tpu_custom_call.1} parent=1 // pred_region
      %106 = dma.done [#allocation6], 12544
    $region53: #{tpu_custom_call.1} parent=1 // pred_fallthru
      _
    // Predicated region
    $region54: #{tpu_custom_call.1} parent=1 // pred_check
      _
    $region55: #{tpu_custom_call.1} parent=1 // pred_check_branch
      %108 = sbr.rel (0) target = $region57
    $region56: #{tpu_custom_call.1} parent=1 // pred_region
      %109 = dma.done [#allocation6], 4096
    $region57: #{tpu_custom_call.1} parent=1 // pred_fallthru
      _
    // Predicated region
    $region58: #{tpu_custom_call.1} parent=1 // pred_check
      _
    $region59: #{tpu_custom_call.1} parent=1 // pred_check_branch
      %111 = sbr.rel (0) target = $region61
    $region60: #{tpu_custom_call.1} parent=1 // pred_region
      %112 = dma.done [#allocation9], 4096
    $region61: #{tpu_custom_call.1} parent=1 // pred_fallthru
      _
    // Predicated region
    $region62: #{tpu_custom_call.1} parent=1 // pred_check
      _
    $region63: #{tpu_custom_call.1} parent=1 // pred_check_branch
      %114 = sbr.rel (0) target = $region65
    $region64: #{tpu_custom_call.1} parent=1 // pred_region
      %115 = dma.done [#allocation9], 4096
    $region65: #{tpu_custom_call.1} parent=1 // pred_fallthru
      _
    // Predicated region
    $region66: #{tpu_custom_call.1} parent=1 // pred_check
      _
    $region67: #{tpu_custom_call.1} parent=1 // pred_check_branch
      %117 = sbr.rel (0) target = $region69
    $region68: #{tpu_custom_call.1} parent=1 // pred_region
      %118 = dma.done [#allocation12], 2048
    $region69: #{tpu_custom_call.1} parent=1 // pred_fallthru
      _
    %v120 = vld [vmem:[#allocation2] sm:$0xff]
    %v121 = vld [vmem:[#allocation2 + $0x8] sm:$0xff]
    %v122 = vld [vmem:[#allocation2 + $0x10] sm:$0xff]
    %v123 = vld [vmem:[#allocation2 + $0x18] sm:$0xff]
    %v124 = vld [vmem:[#allocation2 + $0x20] sm:$0xff]
    %v125 = vld [vmem:[#allocation2 + $0x28] sm:$0xff]
    %v126 = vld [vmem:[#allocation2 + $0x30] sm:$0xff]
    %v127 = vpack.c.bf16 %v120, %v120
    %v128 = vpack.c.bf16 %v121, %v121
    %v129 = vpack.c.bf16 %v122, %v122
    %v130 = vpack.c.bf16 %v123, %v123
    %v131 = vpack.c.bf16 %v124, %v124
    %v132 = vpack.c.bf16 %v125, %v125
    %v133 = vpack.c.bf16 %v126, %v126
    %v134 = vld [vmem:[#allocation5] sm:$0xff]
    %v135 = vld [vmem:[#allocation5 + $0x8] sm:$0xff]
    %v136 = vld [vmem:[#allocation5 + $0x10] sm:$0xff]
    %v137 = vld [vmem:[#allocation5 + $0x18] sm:$0xff]
    %v138 = vld [vmem:[#allocation5 + $0x20] sm:$0xff]
    %v139 = vld [vmem:[#allocation5 + $0x28] sm:$0xff]
    %v140 = vld [vmem:[#allocation5 + $0x30] sm:$0xff]
    %v141 = vld [vmem:[#allocation5 + $0x38] sm:$0xff]
    %v142 = vld [vmem:[#allocation5 + $0x40] sm:$0xff]
    %v143 = vld [vmem:[#allocation5 + $0x48] sm:$0xff]
    %v144 = vld [vmem:[#allocation5 + $0x50] sm:$0xff]
    %v145 = vld [vmem:[#allocation5 + $0x58] sm:$0xff]
    %v146 = vld [vmem:[#allocation5 + $0x60] sm:$0xff]
    %v147 = vld [vmem:[#allocation5 + $0x68] sm:$0xff]
    %v148 = vld [vmem:[#allocation5 + $0x70] sm:$0xff]
    %v149 = vld [vmem:[#allocation5 + $0x78] sm:$0xff]
    %v150 = vld [vmem:[#allocation5 + $0x80] sm:$0xff]
    %v151 = vld [vmem:[#allocation5 + $0x88] sm:$0xff]
    %v152 = vld [vmem:[#allocation5 + $0x90] sm:$0xff]
    %v153 = vld [vmem:[#allocation5 + $0x98] sm:$0xff]
    %v154 = vld [vmem:[#allocation5 + $0xa0] sm:$0xff]
    %v155 = vld [vmem:[#allocation5 + $0xa8] sm:$0xff]
    %v156 = vld [vmem:[#allocation5 + $0xb0] sm:$0xff]
    %v157 = vld [vmem:[#allocation5 + $0xb8] sm:$0xff]
    %v158 = vld [vmem:[#allocation5 + $0xc0] sm:$0xff]
    %v159 = vld [vmem:[#allocation5 + $0xc8] sm:$0xff]
    %v160 = vld [vmem:[#allocation5 + $0xd0] sm:$0xff]
    %v161 = vld [vmem:[#allocation5 + $0xd8] sm:$0xff]
    %v162 = vld [vmem:[#allocation5 + $0xe0] sm:$0xff]
    %v163 = vld [vmem:[#allocation5 + $0xe8] sm:$0xff]
    %v164 = vld [vmem:[#allocation5 + $0xf0] sm:$0xff]
    %v165 = vld [vmem:[#allocation5 + $0xf8] sm:$0xff]
    %v166 = vld [vmem:[#allocation5 + $0x100] sm:$0xff]
    %v167 = vld [vmem:[#allocation5 + $0x108] sm:$0xff]
    %v168 = vld [vmem:[#allocation5 + $0x110] sm:$0xff]
    %v169 = vld [vmem:[#allocation5 + $0x118] sm:$0xff]
    %v170 = vld [vmem:[#allocation5 + $0x120] sm:$0xff]
    %v171 = vld [vmem:[#allocation5 + $0x128] sm:$0xff]
    %v172 = vld [vmem:[#allocation5 + $0x130] sm:$0xff]
    %v173 = vld [vmem:[#allocation5 + $0x138] sm:$0xff]
    %v174 = vld [vmem:[#allocation5 + $0x140] sm:$0xff]
    %v175 = vld [vmem:[#allocation5 + $0x148] sm:$0xff]
    %v176 = vld [vmem:[#allocation5 + $0x150] sm:$0xff]
    %v177 = vld [vmem:[#allocation5 + $0x158] sm:$0xff]
    %v178 = vld [vmem:[#allocation5 + $0x160] sm:$0xff]
    %v179 = vld [vmem:[#allocation5 + $0x168] sm:$0xff]
    %v180 = vld [vmem:[#allocation5 + $0x170] sm:$0xff]
    %v181 = vld [vmem:[#allocation5 + $0x178] sm:$0xff]
    %v182 = vld [vmem:[#allocation5 + $0x180] sm:$0xff]
    %v183 = vld [vmem:[#allocation5 + $0x188] sm:$0xff]
    %v184 = vld [vmem:[#allocation5 + $0x190] sm:$0xff]
    %v185 = vld [vmem:[#allocation5 + $0x198] sm:$0xff]
    %v186 = vld [vmem:[#allocation5 + $0x1a0] sm:$0xff]
    %v187 = vld [vmem:[#allocation5 + $0x1a8] sm:$0xff]
    %v188 = vld [vmem:[#allocation5 + $0x1b0] sm:$0xff]
    %v189 = vld [vmem:[#allocation5 + $0x1b8] sm:$0xff]
    %v190 = vld [vmem:[#allocation5 + $0x1c0] sm:$0xff]
    %v191 = vld [vmem:[#allocation5 + $0x1c8] sm:$0xff]
    %v192 = vld [vmem:[#allocation5 + $0x1d0] sm:$0xff]
    %v193 = vld [vmem:[#allocation5 + $0x1d8] sm:$0xff]
    %v194 = vld [vmem:[#allocation5 + $0x1e0] sm:$0xff]
    %v195 = vld [vmem:[#allocation5 + $0x1e8] sm:$0xff]
    %v196 = vld [vmem:[#allocation5 + $0x1f0] sm:$0xff]
    %v197 = vld [vmem:[#allocation5 + $0x1f8] sm:$0xff]
    %v198 = vld [vmem:[#allocation5 + $0x200] sm:$0xff]
    %v199 = vld [vmem:[#allocation5 + $0x208] sm:$0xff]
    %v200 = vld [vmem:[#allocation5 + $0x210] sm:$0xff]
    %v201 = vld [vmem:[#allocation5 + $0x218] sm:$0xff]
    %v202 = vld [vmem:[#allocation5 + $0x220] sm:$0xff]
    %v203 = vld [vmem:[#allocation5 + $0x228] sm:$0xff]
    %v204 = vld [vmem:[#allocation5 + $0x230] sm:$0xff]
    %v205 = vld [vmem:[#allocation5 + $0x238] sm:$0xff]
    %v206 = vld [vmem:[#allocation5 + $0x240] sm:$0xff]
    %v207 = vld [vmem:[#allocation5 + $0x248] sm:$0xff]
    %v208 = vld [vmem:[#allocation5 + $0x250] sm:$0xff]
    %v209 = vld [vmem:[#allocation5 + $0x258] sm:$0xff]
    %v210 = vld [vmem:[#allocation5 + $0x260] sm:$0xff]
    %v211 = vld [vmem:[#allocation5 + $0x268] sm:$0xff]
    %v212 = vld [vmem:[#allocation5 + $0x270] sm:$0xff]
    %v213 = vld [vmem:[#allocation5 + $0x278] sm:$0xff]
    %v214 = vld [vmem:[#allocation5 + $0x280] sm:$0xff]
    %v215 = vld [vmem:[#allocation5 + $0x288] sm:$0xff]
    %v216 = vld [vmem:[#allocation5 + $0x290] sm:$0xff]
    %v217 = vld [vmem:[#allocation5 + $0x298] sm:$0xff]
    %v218 = vld [vmem:[#allocation5 + $0x2a0] sm:$0xff]
    %v219 = vld [vmem:[#allocation5 + $0x2a8] sm:$0xff]
    %v220 = vld [vmem:[#allocation5 + $0x2b0] sm:$0xff]
    %v221 = vld [vmem:[#allocation5 + $0x2b8] sm:$0xff]
    %v222 = vld [vmem:[#allocation5 + $0x2c0] sm:$0xff]
    %v223 = vld [vmem:[#allocation5 + $0x2c8] sm:$0xff]
    %v224 = vld [vmem:[#allocation5 + $0x2d0] sm:$0xff]
    %v225 = vld [vmem:[#allocation5 + $0x2d8] sm:$0xff]
    %v226 = vld [vmem:[#allocation5 + $0x2e0] sm:$0xff]
    %v227 = vld [vmem:[#allocation5 + $0x2e8] sm:$0xff]
    %v228 = vld [vmem:[#allocation5 + $0x2f0] sm:$0xff]
    %v229 = vld [vmem:[#allocation5 + $0x2f8] sm:$0xff]
    %v230 = vld [vmem:[#allocation5 + $0x300] sm:$0xff]
    %v231 = vld [vmem:[#allocation5 + $0x308] sm:$0xff]
    %v232 = vld [vmem:[%s2] sm:$0x3]
    %v234 = vlaneseq
    %v235 = vshrl.u32 %v234, 7
    %v236 = vsub.s32 0, %v235
    %v237 = vrot.slane %v232, %v236
    %v238 = vlaneseq
    %v239 = vshrl.u32 %v238, 7
    %v240 = vsub.s32 1, %v239
    %v241 = vrot.slane %v232, %v240
    %v342 = vunpack.c.l.b16 %v134
    %v343 = vunpack.c.h.b16 %v134
    %v344 = vunpack.c.l.b16 %v135
    %v345 = vunpack.c.h.b16 %v135
    %v346 = vunpack.c.l.b16 %v136
    %v347 = vunpack.c.h.b16 %v136
    %v348 = vunpack.c.l.b16 %v137
    %v349 = vunpack.c.h.b16 %v137
    %v350 = vunpack.c.l.b16 %v138
    %v351 = vunpack.c.h.b16 %v138
    %v352 = vunpack.c.l.b16 %v139
    %v353 = vunpack.c.h.b16 %v139
    %v354 = vunpack.c.l.b16 %v140
    %v355 = vunpack.c.h.b16 %v140
    %v356 = vunpack.c.l.b16 %v141
    %v357 = vunpack.c.h.b16 %v141
    %v358 = vunpack.c.l.b16 %v142
    %v359 = vunpack.c.h.b16 %v142
    %v360 = vunpack.c.l.b16 %v143
    %v361 = vunpack.c.h.b16 %v143
    %v362 = vunpack.c.l.b16 %v144
    %v363 = vunpack.c.h.b16 %v144
    %v364 = vunpack.c.l.b16 %v145
    %v365 = vunpack.c.h.b16 %v145
    %v366 = vunpack.c.l.b16 %v146
    %v367 = vunpack.c.h.b16 %v146
    %v368 = vunpack.c.l.b16 %v147
    %v369 = vunpack.c.h.b16 %v147
    %v370 = vunpack.c.l.b16 %v148
    %v371 = vunpack.c.h.b16 %v148
    %v372 = vunpack.c.l.b16 %v149
    %v373 = vunpack.c.h.b16 %v149
    %v374 = vunpack.c.l.b16 %v150
    %v375 = vunpack.c.h.b16 %v150
    %v376 = vunpack.c.l.b16 %v151
    %v377 = vunpack.c.h.b16 %v151
    %v378 = vunpack.c.l.b16 %v152
    %v379 = vunpack.c.h.b16 %v152
    %v380 = vunpack.c.l.b16 %v153
    %v381 = vunpack.c.h.b16 %v153
    %v382 = vunpack.c.l.b16 %v154
    %v383 = vunpack.c.h.b16 %v154
    %v384 = vunpack.c.l.b16 %v155
    %v385 = vunpack.c.h.b16 %v155
    %v386 = vunpack.c.l.b16 %v156
    %v387 = vunpack.c.h.b16 %v156
    %v388 = vunpack.c.l.b16 %v157
    %v389 = vunpack.c.h.b16 %v157
    %v390 = vunpack.c.l.b16 %v158
    %v391 = vunpack.c.h.b16 %v158
    %v392 = vunpack.c.l.b16 %v159
    %v393 = vunpack.c.h.b16 %v159
    %v394 = vunpack.c.l.b16 %v160
    %v395 = vunpack.c.h.b16 %v160
    %v396 = vunpack.c.l.b16 %v161
    %v397 = vunpack.c.h.b16 %v161
    %v398 = vunpack.c.l.b16 %v162
    %v399 = vunpack.c.h.b16 %v162
    %v400 = vunpack.c.l.b16 %v163
    %v401 = vunpack.c.h.b16 %v163
    %v402 = vunpack.c.l.b16 %v164
    %v403 = vunpack.c.h.b16 %v164
    %v404 = vunpack.c.l.b16 %v165
    %v405 = vunpack.c.h.b16 %v165
    %v406 = vunpack.c.l.b16 %v166
    %v407 = vunpack.c.h.b16 %v166
    %v408 = vunpack.c.l.b16 %v167
    %v409 = vunpack.c.h.b16 %v167
    %v410 = vunpack.c.l.b16 %v168
    %v411 = vunpack.c.h.b16 %v168
    %v412 = vunpack.c.l.b16 %v169
    %v413 = vunpack.c.h.b16 %v169
    %v414 = vunpack.c.l.b16 %v170
    %v415 = vunpack.c.h.b16 %v170
    %v416 = vunpack.c.l.b16 %v171
    %v417 = vunpack.c.h.b16 %v171
    %v418 = vunpack.c.l.b16 %v172
    %v419 = vunpack.c.h.b16 %v172
    %v420 = vunpack.c.l.b16 %v173
    %v421 = vunpack.c.h.b16 %v173
    %v422 = vunpack.c.l.b16 %v174
    %v423 = vunpack.c.h.b16 %v174
    %v424 = vunpack.c.l.b16 %v175
    %v425 = vunpack.c.h.b16 %v175
    %v426 = vunpack.c.l.b16 %v176
    %v427 = vunpack.c.h.b16 %v176
    %v428 = vunpack.c.l.b16 %v177
    %v429 = vunpack.c.h.b16 %v177
    %v430 = vunpack.c.l.b16 %v178
    %v431 = vunpack.c.h.b16 %v178
    %v432 = vunpack.c.l.b16 %v179
    %v433 = vunpack.c.h.b16 %v179
    %v434 = vunpack.c.l.b16 %v180
    %v435 = vunpack.c.h.b16 %v180
    %v436 = vunpack.c.l.b16 %v181
    %v437 = vunpack.c.h.b16 %v181
    %v438 = vunpack.c.l.b16 %v182
    %v439 = vunpack.c.h.b16 %v182
    %v440 = vunpack.c.l.b16 %v183
    %v441 = vunpack.c.h.b16 %v183
    %v442 = vunpack.c.l.b16 %v184
    %v443 = vunpack.c.h.b16 %v184
    %v444 = vunpack.c.l.b16 %v185
    %v445 = vunpack.c.h.b16 %v185
    %v446 = vunpack.c.l.b16 %v186
    %v447 = vunpack.c.h.b16 %v186
    %v448 = vunpack.c.l.b16 %v187
    %v449 = vunpack.c.h.b16 %v187
    %v450 = vunpack.c.l.b16 %v188
    %v451 = vunpack.c.h.b16 %v188
    %v452 = vunpack.c.l.b16 %v189
    %v453 = vunpack.c.h.b16 %v189
    %v454 = vunpack.c.l.b16 %v190
    %v455 = vunpack.c.h.b16 %v190
    %v456 = vunpack.c.l.b16 %v191
    %v457 = vunpack.c.h.b16 %v191
    %v458 = vunpack.c.l.b16 %v192
    %v459 = vunpack.c.h.b16 %v192
    %v460 = vunpack.c.l.b16 %v193
    %v461 = vunpack.c.h.b16 %v193
    %v462 = vunpack.c.l.b16 %v194
    %v463 = vunpack.c.h.b16 %v194
    %v464 = vunpack.c.l.b16 %v195
    %v465 = vunpack.c.h.b16 %v195
    %v466 = vunpack.c.l.b16 %v196
    %v467 = vunpack.c.h.b16 %v196
    %v468 = vunpack.c.l.b16 %v197
    %v469 = vunpack.c.h.b16 %v197
    %v470 = vunpack.c.l.b16 %v198
    %v471 = vunpack.c.h.b16 %v198
    %v472 = vunpack.c.l.b16 %v199
    %v473 = vunpack.c.h.b16 %v199
    %v474 = vunpack.c.l.b16 %v200
    %v475 = vunpack.c.h.b16 %v200
    %v476 = vunpack.c.l.b16 %v201
    %v477 = vunpack.c.h.b16 %v201
    %v478 = vunpack.c.l.b16 %v202
    %v479 = vunpack.c.h.b16 %v202
    %v480 = vunpack.c.l.b16 %v203
    %v481 = vunpack.c.h.b16 %v203
    %v482 = vunpack.c.l.b16 %v204
    %v483 = vunpack.c.h.b16 %v204
    %v484 = vunpack.c.l.b16 %v205
    %v485 = vunpack.c.h.b16 %v205
    %v486 = vunpack.c.l.b16 %v206
    %v487 = vunpack.c.h.b16 %v206
    %v488 = vunpack.c.l.b16 %v207
    %v489 = vunpack.c.h.b16 %v207
    %v490 = vunpack.c.l.b16 %v208
    %v491 = vunpack.c.h.b16 %v208
    %v492 = vunpack.c.l.b16 %v209
    %v493 = vunpack.c.h.b16 %v209
    %v494 = vunpack.c.l.b16 %v210
    %v495 = vunpack.c.h.b16 %v210
    %v496 = vunpack.c.l.b16 %v211
    %v497 = vunpack.c.h.b16 %v211
    %v498 = vunpack.c.l.b16 %v212
    %v499 = vunpack.c.h.b16 %v212
    %v500 = vunpack.c.l.b16 %v213
    %v501 = vunpack.c.h.b16 %v213
    %v502 = vunpack.c.l.b16 %v214
    %v503 = vunpack.c.h.b16 %v214
    %v504 = vunpack.c.l.b16 %v215
    %v505 = vunpack.c.h.b16 %v215
    %v506 = vunpack.c.l.b16 %v216
    %v507 = vunpack.c.h.b16 %v216
    %v508 = vunpack.c.l.b16 %v217
    %v509 = vunpack.c.h.b16 %v217
    %v510 = vunpack.c.l.b16 %v218
    %v511 = vunpack.c.h.b16 %v218
    %v512 = vunpack.c.l.b16 %v219
    %v513 = vunpack.c.h.b16 %v219
    %v514 = vunpack.c.l.b16 %v220
    %v515 = vunpack.c.h.b16 %v220
    %v516 = vunpack.c.l.b16 %v221
    %v517 = vunpack.c.h.b16 %v221
    %v518 = vunpack.c.l.b16 %v222
    %v519 = vunpack.c.h.b16 %v222
    %v520 = vunpack.c.l.b16 %v223
    %v521 = vunpack.c.h.b16 %v223
    %v522 = vunpack.c.l.b16 %v224
    %v523 = vunpack.c.h.b16 %v224
    %v524 = vunpack.c.l.b16 %v225
    %v525 = vunpack.c.h.b16 %v225
    %v526 = vunpack.c.l.b16 %v226
    %v527 = vunpack.c.h.b16 %v226
    %v528 = vunpack.c.l.b16 %v227
    %v529 = vunpack.c.h.b16 %v227
    %v530 = vunpack.c.l.b16 %v228
    %v531 = vunpack.c.h.b16 %v228
    %v532 = vunpack.c.l.b16 %v229
    %v533 = vunpack.c.h.b16 %v229
    %v534 = vunpack.c.l.b16 %v230
    %v535 = vunpack.c.h.b16 %v230
    %v536 = vunpack.c.l.b16 %v231
    %v537 = vunpack.c.h.b16 %v231
    %v538 = vpack.c.b16 %v344, %v342
    %v539 = vpack.c.b16 %v345, %v343
    %v540 = vpack.c.b16 %v348, %v346
    %v541 = vpack.c.b16 %v349, %v347
    %v542 = vpack.c.b16 %v352, %v350
    %v543 = vpack.c.b16 %v353, %v351
    %v544 = vpack.c.b16 %v356, %v354
    %v545 = vpack.c.b16 %v357, %v355
    %v546 = vpack.c.b16 %v360, %v358
    %v547 = vpack.c.b16 %v361, %v359
    %v548 = vpack.c.b16 %v364, %v362
    %v549 = vpack.c.b16 %v365, %v363
    %v550 = vpack.c.b16 %v368, %v366
    %v551 = vpack.c.b16 %v369, %v367
    %v552 = vpack.c.b16 %v372, %v370
    %v553 = vpack.c.b16 %v373, %v371
    %v554 = vpack.c.b16 %v376, %v374
    %v555 = vpack.c.b16 %v377, %v375
    %v556 = vpack.c.b16 %v380, %v378
    %v557 = vpack.c.b16 %v381, %v379
    %v558 = vpack.c.b16 %v384, %v382
    %v559 = vpack.c.b16 %v385, %v383
    %v560 = vpack.c.b16 %v388, %v386
    %v561 = vpack.c.b16 %v389, %v387
    %v562 = vpack.c.b16 %v392, %v390
    %v563 = vpack.c.b16 %v393, %v391
    %v564 = vpack.c.b16 %v396, %v394
    %v565 = vpack.c.b16 %v397, %v395
    %v566 = vpack.c.b16 %v400, %v398
    %v567 = vpack.c.b16 %v401, %v399
    %v568 = vpack.c.b16 %v404, %v402
    %v569 = vpack.c.b16 %v405, %v403
    %v570 = vpack.c.b16 %v408, %v406
    %v571 = vpack.c.b16 %v409, %v407
    %v572 = vpack.c.b16 %v412, %v410
    %v573 = vpack.c.b16 %v413, %v411
    %v574 = vpack.c.b16 %v416, %v414
    %v575 = vpack.c.b16 %v417, %v415
    %v576 = vpack.c.b16 %v420, %v418
    %v577 = vpack.c.b16 %v421, %v419
    %v578 = vpack.c.b16 %v424, %v422
    %v579 = vpack.c.b16 %v425, %v423
    %v580 = vpack.c.b16 %v428, %v426
    %v581 = vpack.c.b16 %v429, %v427
    %v582 = vpack.c.b16 %v432, %v430
    %v583 = vpack.c.b16 %v433, %v431
    %v584 = vpack.c.b16 %v436, %v434
    %v585 = vpack.c.b16 %v437, %v435
    %v586 = vpack.c.b16 %v440, %v438
    %v587 = vpack.c.b16 %v441, %v439
    %v588 = vpack.c.b16 %v444, %v442
    %v589 = vpack.c.b16 %v445, %v443
    %v590 = vpack.c.b16 %v448, %v446
    %v591 = vpack.c.b16 %v449, %v447
    %v592 = vpack.c.b16 %v452, %v450
    %v593 = vpack.c.b16 %v453, %v451
    %v594 = vpack.c.b16 %v456, %v454
    %v595 = vpack.c.b16 %v457, %v455
    %v596 = vpack.c.b16 %v460, %v458
    %v597 = vpack.c.b16 %v461, %v459
    %v598 = vpack.c.b16 %v464, %v462
    %v599 = vpack.c.b16 %v465, %v463
    %v600 = vpack.c.b16 %v468, %v466
    %v601 = vpack.c.b16 %v469, %v467
    %v602 = vpack.c.b16 %v472, %v470
    %v603 = vpack.c.b16 %v473, %v471
    %v604 = vpack.c.b16 %v476, %v474
    %v605 = vpack.c.b16 %v477, %v475
    %v606 = vpack.c.b16 %v480, %v478
    %v607 = vpack.c.b16 %v481, %v479
    %v608 = vpack.c.b16 %v484, %v482
    %v609 = vpack.c.b16 %v485, %v483
    %v610 = vpack.c.b16 %v488, %v486
    %v611 = vpack.c.b16 %v489, %v487
    %v612 = vpack.c.b16 %v492, %v490
    %v613 = vpack.c.b16 %v493, %v491
    %v614 = vpack.c.b16 %v496, %v494
    %v615 = vpack.c.b16 %v497, %v495
    %v616 = vpack.c.b16 %v500, %v498
    %v617 = vpack.c.b16 %v501, %v499
    %v618 = vpack.c.b16 %v504, %v502
    %v619 = vpack.c.b16 %v505, %v503
    %v620 = vpack.c.b16 %v508, %v506
    %v621 = vpack.c.b16 %v509, %v507
    %v622 = vpack.c.b16 %v512, %v510
    %v623 = vpack.c.b16 %v513, %v511
    %v624 = vpack.c.b16 %v516, %v514
    %v625 = vpack.c.b16 %v517, %v515
    %v626 = vpack.c.b16 %v520, %v518
    %v627 = vpack.c.b16 %v521, %v519
    %v628 = vpack.c.b16 %v524, %v522
    %v629 = vpack.c.b16 %v525, %v523
    %v630 = vpack.c.b16 %v528, %v526
    %v631 = vpack.c.b16 %v529, %v527
    %v632 = vpack.c.b16 %v532, %v530
    %v633 = vpack.c.b16 %v533, %v531
    %v634 = vpack.c.b16 %v536, %v534
    %v635 = vpack.c.b16 %v537, %v535
    %vm734 = vcmask 130048
    %v736 = vsel %vm734, %v133, 0
    %738 = vmatprep.subr.bf16.mxu0 %v539
    %739 = vmatpush1.bf16.msra.mxu0 %v538
    %740 = vmatprep.subr.bf16.mxu0 %v541
    %741 = vmatpush1.bf16.msra.mxu0 %v540
    %742 = vmatprep.subr.bf16.mxu0 %v543
    %743 = vmatpush1.bf16.msra.mxu0 %v542
    %744 = vmatprep.subr.bf16.mxu0 %v545
    %745 = vmatpush1.bf16.msra.mxu0 %v544
    %746 = vmatprep.subr.bf16.mxu0 %v547
    %747 = vmatpush1.bf16.msra.mxu0 %v546
    %748 = vmatprep.subr.bf16.mxu0 %v549
    %749 = vmatpush1.bf16.msra.mxu0 %v548
    %750 = vmatprep.subr.bf16.mxu0 %v551
    %751 = vmatpush1.bf16.msra.mxu0 %v550
    %752 = vmatprep.subr.bf16.mxu0 %v553
    %753 = vmatpush1.bf16.msra.mxu0 %v552
    %754 = vmatprep.subr.bf16.mxu0 %v555
    %755 = vmatpush1.bf16.msra.mxu0 %v554
    %756 = vmatprep.subr.bf16.mxu0 %v557
    %757 = vmatpush1.bf16.msra.mxu0 %v556
    %758 = vmatprep.subr.bf16.mxu0 %v559
    %759 = vmatpush1.bf16.msra.mxu0 %v558
    %760 = vmatprep.subr.bf16.mxu0 %v561
    %761 = vmatpush1.bf16.msra.mxu0 %v560
    %762 = vmatprep.subr.bf16.mxu0 %v563
    %763 = vmatpush1.bf16.msra.mxu0 %v562
    %764 = vmatprep.subr.bf16.mxu0 %v565
    %765 = vmatpush1.bf16.msra.mxu0 %v564
    %766 = vmatprep.subr.bf16.mxu0 %v567
    %767 = vmatpush1.bf16.msra.mxu0 %v566
    %768 = vmatprep.subr.bf16.mxu0 %v569
    %769 = vmatpush1.bf16.msra.mxu0 %v568
    %770 = vmatprep.mubr.bf16.mxu0 %v128
    %771 = vmatmul.mubr.bf16.gmra.mrb[0].mxu0 %v127
    %v772 = vpop.f32.mrb[0].mxu0
    %v773 = vadd.f32 %v237, %v772
    %v774 = vpop.f32.mrb[0].mxu0
    %v775 = vadd.f32 %v241, %v774
    %v776 = vpop.f32.mrb[0].mxu0
    %v777 = vpop.f32.mrb[0].mxu0
    %778 = vdwg.mxu0
    %779 = vmatprep.subr.bf16.mxu0 %v571
    %780 = vmatpush1.bf16.msra.mxu0 %v570
    %781 = vmatprep.subr.bf16.mxu0 %v573
    %782 = vmatpush1.bf16.msra.mxu0 %v572
    %783 = vmatprep.subr.bf16.mxu0 %v575
    %784 = vmatpush1.bf16.msra.mxu0 %v574
    %785 = vmatprep.subr.bf16.mxu0 %v577
    %786 = vmatpush1.bf16.msra.mxu0 %v576
    %787 = vmatprep.subr.bf16.mxu0 %v579
    %788 = vmatpush1.bf16.msra.mxu0 %v578
    %789 = vmatprep.subr.bf16.mxu0 %v581
    %790 = vmatpush1.bf16.msra.mxu0 %v580
    %791 = vmatprep.subr.bf16.mxu0 %v583
    %792 = vmatpush1.bf16.msra.mxu0 %v582
    %793 = vmatprep.subr.bf16.mxu0 %v585
    %794 = vmatpush1.bf16.msra.mxu0 %v584
    %795 = vmatprep.subr.bf16.mxu0 %v587
    %796 = vmatpush1.bf16.msra.mxu0 %v586
    %797 = vmatprep.subr.bf16.mxu0 %v589
    %798 = vmatpush1.bf16.msra.mxu0 %v588
    %799 = vmatprep.subr.bf16.mxu0 %v591
    %800 = vmatpush1.bf16.msra.mxu0 %v590
    %801 = vmatprep.subr.bf16.mxu0 %v593
    %802 = vmatpush1.bf16.msra.mxu0 %v592
    %803 = vmatprep.subr.bf16.mxu0 %v595
    %804 = vmatpush1.bf16.msra.mxu0 %v594
    %805 = vmatprep.subr.bf16.mxu0 %v597
    %806 = vmatpush1.bf16.msra.mxu0 %v596
    %807 = vmatprep.subr.bf16.mxu0 %v599
    %808 = vmatpush1.bf16.msra.mxu0 %v598
    %809 = vmatprep.subr.bf16.mxu0 %v601
    %810 = vmatpush1.bf16.msra.mxu0 %v600
    %811 = vmatprep.mubr.bf16.mxu0 %v130
    %812 = vmatmul.mubr.bf16.gmra.mrb[0].mxu0 %v129
    %v813 = vpop.f32.mrb[0].mxu0
    %v814 = vadd.f32 %v773, %v813
    %v815 = vpop.f32.mrb[0].mxu0
    %v816 = vadd.f32 %v775, %v815
    %v817 = vpop.f32.mrb[0].mxu0
    %v818 = vpop.f32.mrb[0].mxu0
    %819 = vdwg.mxu0
    %820 = vmatprep.subr.bf16.mxu0 %v603
    %821 = vmatpush1.bf16.msra.mxu0 %v602
    %822 = vmatprep.subr.bf16.mxu0 %v605
    %823 = vmatpush1.bf16.msra.mxu0 %v604
    %824 = vmatprep.subr.bf16.mxu0 %v607
    %825 = vmatpush1.bf16.msra.mxu0 %v606
    %826 = vmatprep.subr.bf16.mxu0 %v609
    %827 = vmatpush1.bf16.msra.mxu0 %v608
    %828 = vmatprep.subr.bf16.mxu0 %v611
    %829 = vmatpush1.bf16.msra.mxu0 %v610
    %830 = vmatprep.subr.bf16.mxu0 %v613
    %831 = vmatpush1.bf16.msra.mxu0 %v612
    %832 = vmatprep.subr.bf16.mxu0 %v615
    %833 = vmatpush1.bf16.msra.mxu0 %v614
    %834 = vmatprep.subr.bf16.mxu0 %v617
    %835 = vmatpush1.bf16.msra.mxu0 %v616
    %836 = vmatprep.subr.bf16.mxu0 %v619
    %837 = vmatpush1.bf16.msra.mxu0 %v618
    %838 = vmatprep.subr.bf16.mxu0 %v621
    %839 = vmatpush1.bf16.msra.mxu0 %v620
    %840 = vmatprep.subr.bf16.mxu0 %v623
    %841 = vmatpush1.bf16.msra.mxu0 %v622
    %842 = vmatprep.subr.bf16.mxu0 %v625
    %843 = vmatpush1.bf16.msra.mxu0 %v624
    %844 = vmatprep.subr.bf16.mxu0 %v627
    %845 = vmatpush1.bf16.msra.mxu0 %v626
    %846 = vmatprep.subr.bf16.mxu0 %v629
    %847 = vmatpush1.bf16.msra.mxu0 %v628
    %848 = vmatprep.subr.bf16.mxu0 %v631
    %849 = vmatpush1.bf16.msra.mxu0 %v630
    %850 = vmatprep.subr.bf16.mxu0 %v633
    %851 = vmatpush1.bf16.msra.mxu0 %v632
    %852 = vmatprep.mubr.bf16.mxu0 %v132
    %853 = vmatmul.mubr.bf16.gmra.mrb[0].mxu0 %v131
    %v854 = vpop.f32.mrb[0].mxu0
    %v855 = vadd.f32 %v814, %v854
    %v856 = vpop.f32.mrb[0].mxu0
    %v857 = vadd.f32 %v816, %v856
    %v858 = vpop.f32.mrb[0].mxu0
    %v859 = vpop.f32.mrb[0].mxu0
    %860 = vdwg.mxu0
    %861 = vmatprep.subr.bf16.mxu0 %v635
    %862 = vmatpush1.bf16.msra.mxu0 %v634
    %863 = vmatprep.subr.bf16.mxu0 0
    %864 = vmatpush1.bf16.msra.mxu0 0
    %865 = vmatprep.subr.bf16.mxu0 0
    %866 = vmatpush1.bf16.msra.mxu0 0
    %867 = vmatprep.subr.bf16.mxu0 0
    %868 = vmatpush1.bf16.msra.mxu0 0
    %869 = vmatprep.subr.bf16.mxu0 0
    %870 = vmatpush1.bf16.msra.mxu0 0
    %871 = vmatprep.subr.bf16.mxu0 0
    %872 = vmatpush1.bf16.msra.mxu0 0
    %873 = vmatprep.subr.bf16.mxu0 0
    %874 = vmatpush1.bf16.msra.mxu0 0
    %875 = vmatprep.subr.bf16.mxu0 0
    %876 = vmatpush1.bf16.msra.mxu0 0
    %877 = vmatprep.subr.bf16.mxu0 0
    %878 = vmatpush1.bf16.msra.mxu0 0
    %879 = vmatprep.subr.bf16.mxu0 0
    %880 = vmatpush1.bf16.msra.mxu0 0
    %881 = vmatprep.subr.bf16.mxu0 0
    %882 = vmatpush1.bf16.msra.mxu0 0
    %883 = vmatprep.subr.bf16.mxu0 0
    %884 = vmatpush1.bf16.msra.mxu0 0
    %885 = vmatprep.subr.bf16.mxu0 0
    %886 = vmatpush1.bf16.msra.mxu0 0
    %887 = vmatprep.subr.bf16.mxu0 0
    %888 = vmatpush1.bf16.msra.mxu0 0
    %889 = vmatprep.subr.bf16.mxu0 0
    %890 = vmatpush1.bf16.msra.mxu0 0
    %891 = vmatprep.subr.bf16.mxu0 0
    %892 = vmatpush1.bf16.msra.mxu0 0
    %893 = vmatprep.mubr.bf16.mxu0 0
    %894 = vmatmul.mubr.bf16.gmra.mrb[0].mxu0 %v736
    %v895 = vpop.f32.mrb[0].mxu0
    %v896 = vadd.f32 %v855, %v895
    %v897 = vpop.f32.mrb[0].mxu0
    %v898 = vadd.f32 %v857, %v897
    %v899 = vpop.f32.mrb[0].mxu0
    %v900 = vpop.f32.mrb[0].mxu0
    %901 = vdwg.mxu0
    %v902 = vmax.f32 %v896, 0.0
    %v903 = vmax.f32 %v898, 0.0
    %v904 = vpack.c.bf16 %v902, %v902
    %v905 = vpack.c.bf16 %v903, %v903
    %v906 = vld [vmem:[#allocation7] sm:$0xff]
    %v907 = vld [vmem:[#allocation7 + $0x8] sm:$0xff]
    %v908 = vld [vmem:[#allocation7 + $0x10] sm:$0xff]
    %v909 = vld [vmem:[#allocation7 + $0x18] sm:$0xff]
    %v910 = vld [vmem:[#allocation7 + $0x20] sm:$0xff]
    %v911 = vld [vmem:[#allocation7 + $0x28] sm:$0xff]
    %v912 = vld [vmem:[#allocation7 + $0x30] sm:$0xff]
    %v913 = vld [vmem:[#allocation7 + $0x38] sm:$0xff]
    %v914 = vld [vmem:[#allocation7 + $0x40] sm:$0xff]
    %v915 = vld [vmem:[#allocation7 + $0x48] sm:$0xff]
    %v916 = vld [vmem:[#allocation7 + $0x50] sm:$0xff]
    %v917 = vld [vmem:[#allocation7 + $0x58] sm:$0xff]
    %v918 = vld [vmem:[#allocation7 + $0x60] sm:$0xff]
    %v919 = vld [vmem:[#allocation7 + $0x68] sm:$0xff]
    %v920 = vld [vmem:[#allocation7 + $0x70] sm:$0xff]
    %v921 = vld [vmem:[#allocation7 + $0x78] sm:$0xff]
    %v922 = vld [vmem:[#allocation7 + $0x80] sm:$0xff]
    %v923 = vld [vmem:[#allocation7 + $0x88] sm:$0xff]
    %v924 = vld [vmem:[#allocation7 + $0x90] sm:$0xff]
    %v925 = vld [vmem:[#allocation7 + $0x98] sm:$0xff]
    %v926 = vld [vmem:[#allocation7 + $0xa0] sm:$0xff]
    %v927 = vld [vmem:[#allocation7 + $0xa8] sm:$0xff]
    %v928 = vld [vmem:[#allocation7 + $0xb0] sm:$0xff]
    %v929 = vld [vmem:[#allocation7 + $0xb8] sm:$0xff]
    %v930 = vld [vmem:[#allocation7 + $0xc0] sm:$0xff]
    %v931 = vld [vmem:[#allocation7 + $0xc8] sm:$0xff]
    %v932 = vld [vmem:[#allocation7 + $0xd0] sm:$0xff]
    %v933 = vld [vmem:[#allocation7 + $0xd8] sm:$0xff]
    %v934 = vld [vmem:[#allocation7 + $0xe0] sm:$0xff]
    %v935 = vld [vmem:[#allocation7 + $0xe8] sm:$0xff]
    %v936 = vld [vmem:[#allocation7 + $0xf0] sm:$0xff]
    %v937 = vld [vmem:[#allocation7 + $0xf8] sm:$0xff]
    %v938 = vld [vmem:[%s4] sm:$0x3]
    %v940 = vlaneseq
    %v941 = vshrl.u32 %v940, 7
    %v942 = vsub.s32 0, %v941
    %v943 = vrot.slane %v938, %v942
    %v944 = vlaneseq
    %v945 = vshrl.u32 %v944, 7
    %v946 = vsub.s32 1, %v945
    %v947 = vrot.slane %v938, %v946
    %v982 = vunpack.c.l.b16 %v906
    %v983 = vunpack.c.h.b16 %v906
    %v984 = vunpack.c.l.b16 %v907
    %v985 = vunpack.c.h.b16 %v907
    %v986 = vunpack.c.l.b16 %v908
    %v987 = vunpack.c.h.b16 %v908
    %v988 = vunpack.c.l.b16 %v909
    %v989 = vunpack.c.h.b16 %v909
    %v990 = vunpack.c.l.b16 %v910
    %v991 = vunpack.c.h.b16 %v910
    %v992 = vunpack.c.l.b16 %v911
    %v993 = vunpack.c.h.b16 %v911
    %v994 = vunpack.c.l.b16 %v912
    %v995 = vunpack.c.h.b16 %v912
    %v996 = vunpack.c.l.b16 %v913
    %v997 = vunpack.c.h.b16 %v913
    %v998 = vunpack.c.l.b16 %v914
    %v999 = vunpack.c.h.b16 %v914
    %v1000 = vunpack.c.l.b16 %v915
    %v1001 = vunpack.c.h.b16 %v915
    %v1002 = vunpack.c.l.b16 %v916
    %v1003 = vunpack.c.h.b16 %v916
    %v1004 = vunpack.c.l.b16 %v917
    %v1005 = vunpack.c.h.b16 %v917
    %v1006 = vunpack.c.l.b16 %v918
    %v1007 = vunpack.c.h.b16 %v918
    %v1008 = vunpack.c.l.b16 %v919
    %v1009 = vunpack.c.h.b16 %v919
    %v1010 = vunpack.c.l.b16 %v920
    %v1011 = vunpack.c.h.b16 %v920
    %v1012 = vunpack.c.l.b16 %v921
    %v1013 = vunpack.c.h.b16 %v921
    %v1014 = vunpack.c.l.b16 %v922
    %v1015 = vunpack.c.h.b16 %v922
    %v1016 = vunpack.c.l.b16 %v923
    %v1017 = vunpack.c.h.b16 %v923
    %v1018 = vunpack.c.l.b16 %v924
    %v1019 = vunpack.c.h.b16 %v924
    %v1020 = vunpack.c.l.b16 %v925
    %v1021 = vunpack.c.h.b16 %v925
    %v1022 = vunpack.c.l.b16 %v926
    %v1023 = vunpack.c.h.b16 %v926
    %v1024 = vunpack.c.l.b16 %v927
    %v1025 = vunpack.c.h.b16 %v927
    %v1026 = vunpack.c.l.b16 %v928
    %v1027 = vunpack.c.h.b16 %v928
    %v1028 = vunpack.c.l.b16 %v929
    %v1029 = vunpack.c.h.b16 %v929
    %v1030 = vunpack.c.l.b16 %v930
    %v1031 = vunpack.c.h.b16 %v930
    %v1032 = vunpack.c.l.b16 %v931
    %v1033 = vunpack.c.h.b16 %v931
    %v1034 = vunpack.c.l.b16 %v932
    %v1035 = vunpack.c.h.b16 %v932
    %v1036 = vunpack.c.l.b16 %v933
    %v1037 = vunpack.c.h.b16 %v933
    %v1038 = vunpack.c.l.b16 %v934
    %v1039 = vunpack.c.h.b16 %v934
    %v1040 = vunpack.c.l.b16 %v935
    %v1041 = vunpack.c.h.b16 %v935
    %v1042 = vunpack.c.l.b16 %v936
    %v1043 = vunpack.c.h.b16 %v936
    %v1044 = vunpack.c.l.b16 %v937
    %v1045 = vunpack.c.h.b16 %v937
    %v1046 = vpack.c.b16 %v984, %v982
    %v1047 = vpack.c.b16 %v985, %v983
    %v1048 = vpack.c.b16 %v988, %v986
    %v1049 = vpack.c.b16 %v989, %v987
    %v1050 = vpack.c.b16 %v992, %v990
    %v1051 = vpack.c.b16 %v993, %v991
    %v1052 = vpack.c.b16 %v996, %v994
    %v1053 = vpack.c.b16 %v997, %v995
    %v1054 = vpack.c.b16 %v1000, %v998
    %v1055 = vpack.c.b16 %v1001, %v999
    %v1056 = vpack.c.b16 %v1004, %v1002
    %v1057 = vpack.c.b16 %v1005, %v1003
    %v1058 = vpack.c.b16 %v1008, %v1006
    %v1059 = vpack.c.b16 %v1009, %v1007
    %v1060 = vpack.c.b16 %v1012, %v1010
    %v1061 = vpack.c.b16 %v1013, %v1011
    %v1062 = vpack.c.b16 %v1016, %v1014
    %v1063 = vpack.c.b16 %v1017, %v1015
    %v1064 = vpack.c.b16 %v1020, %v1018
    %v1065 = vpack.c.b16 %v1021, %v1019
    %v1066 = vpack.c.b16 %v1024, %v1022
    %v1067 = vpack.c.b16 %v1025, %v1023
    %v1068 = vpack.c.b16 %v1028, %v1026
    %v1069 = vpack.c.b16 %v1029, %v1027
    %v1070 = vpack.c.b16 %v1032, %v1030
    %v1071 = vpack.c.b16 %v1033, %v1031
    %v1072 = vpack.c.b16 %v1036, %v1034
    %v1073 = vpack.c.b16 %v1037, %v1035
    %v1074 = vpack.c.b16 %v1040, %v1038
    %v1075 = vpack.c.b16 %v1041, %v1039
    %v1076 = vpack.c.b16 %v1044, %v1042
    %v1077 = vpack.c.b16 %v1045, %v1043
    %1110 = vmatprep.subr.bf16.mxu0 %v1047
    %1111 = vmatpush1.bf16.msra.mxu0 %v1046
    %1112 = vmatprep.subr.bf16.mxu0 %v1049
    %1113 = vmatpush1.bf16.msra.mxu0 %v1048
    %1114 = vmatprep.subr.bf16.mxu0 %v1051
    %1115 = vmatpush1.bf16.msra.mxu0 %v1050
    %1116 = vmatprep.subr.bf16.mxu0 %v1053
    %1117 = vmatpush1.bf16.msra.mxu0 %v1052
    %1118 = vmatprep.subr.bf16.mxu0 %v1055
    %1119 = vmatpush1.bf16.msra.mxu0 %v1054
    %1120 = vmatprep.subr.bf16.mxu0 %v1057
    %1121 = vmatpush1.bf16.msra.mxu0 %v1056
    %1122 = vmatprep.subr.bf16.mxu0 %v1059
    %1123 = vmatpush1.bf16.msra.mxu0 %v1058
    %1124 = vmatprep.subr.bf16.mxu0 %v1061
    %1125 = vmatpush1.bf16.msra.mxu0 %v1060
    %1126 = vmatprep.subr.bf16.mxu0 %v1063
    %1127 = vmatpush1.bf16.msra.mxu0 %v1062
    %1128 = vmatprep.subr.bf16.mxu0 %v1065
    %1129 = vmatpush1.bf16.msra.mxu0 %v1064
    %1130 = vmatprep.subr.bf16.mxu0 %v1067
    %1131 = vmatpush1.bf16.msra.mxu0 %v1066
    %1132 = vmatprep.subr.bf16.mxu0 %v1069
    %1133 = vmatpush1.bf16.msra.mxu0 %v1068
    %1134 = vmatprep.subr.bf16.mxu0 %v1071
    %1135 = vmatpush1.bf16.msra.mxu0 %v1070
    %1136 = vmatprep.subr.bf16.mxu0 %v1073
    %1137 = vmatpush1.bf16.msra.mxu0 %v1072
    %1138 = vmatprep.subr.bf16.mxu0 %v1075
    %1139 = vmatpush1.bf16.msra.mxu0 %v1074
    %1140 = vmatprep.subr.bf16.mxu0 %v1077
    %1141 = vmatpush1.bf16.msra.mxu0 %v1076
    %1142 = vmatprep.mubr.bf16.mxu0 %v905
    %1143 = vmatmul.mubr.bf16.gmra.mrb[0].mxu0 %v904
    %v1144 = vpop.f32.mrb[0].mxu0
    %v1145 = vadd.f32 %v943, %v1144
    %v1146 = vpop.f32.mrb[0].mxu0
    %v1147 = vadd.f32 %v947, %v1146
    %v1148 = vpop.f32.mrb[0].mxu0
    %v1149 = vpop.f32.mrb[0].mxu0
    %1150 = vdwg.mxu0
    %v1151 = vmax.f32 %v1145, 0.0
    %v1152 = vmax.f32 %v1147, 0.0
    %v1153 = vpack.c.bf16 %v1151, %v1151
    %v1154 = vpack.c.bf16 %v1152, %v1152
    %v1155 = vld [vmem:[#allocation8] sm:$0xff]
    %v1156 = vld [vmem:[#allocation8 + $0x8] sm:$0xff]
    %v1157 = vld [vmem:[#allocation8 + $0x10] sm:$0xff]
    %v1158 = vld [vmem:[#allocation8 + $0x18] sm:$0xff]
    %v1159 = vld [vmem:[#allocation8 + $0x20] sm:$0xff]
    %v1160 = vld [vmem:[#allocation8 + $0x28] sm:$0xff]
    %v1161 = vld [vmem:[#allocation8 + $0x30] sm:$0xff]
    %v1162 = vld [vmem:[#allocation8 + $0x38] sm:$0xff]
    %v1163 = vld [vmem:[#allocation8 + $0x40] sm:$0xff]
    %v1164 = vld [vmem:[#allocation8 + $0x48] sm:$0xff]
    %v1165 = vld [vmem:[#allocation8 + $0x50] sm:$0xff]
    %v1166 = vld [vmem:[#allocation8 + $0x58] sm:$0xff]
    %v1167 = vld [vmem:[#allocation8 + $0x60] sm:$0xff]
    %v1168 = vld [vmem:[#allocation8 + $0x68] sm:$0xff]
    %v1169 = vld [vmem:[#allocation8 + $0x70] sm:$0xff]
    %v1170 = vld [vmem:[#allocation8 + $0x78] sm:$0xff]
    %v1171 = vld [vmem:[#allocation8 + $0x80] sm:$0xff]
    %v1172 = vld [vmem:[#allocation8 + $0x88] sm:$0xff]
    %v1173 = vld [vmem:[#allocation8 + $0x90] sm:$0xff]
    %v1174 = vld [vmem:[#allocation8 + $0x98] sm:$0xff]
    %v1175 = vld [vmem:[#allocation8 + $0xa0] sm:$0xff]
    %v1176 = vld [vmem:[#allocation8 + $0xa8] sm:$0xff]
    %v1177 = vld [vmem:[#allocation8 + $0xb0] sm:$0xff]
    %v1178 = vld [vmem:[#allocation8 + $0xb8] sm:$0xff]
    %v1179 = vld [vmem:[#allocation8 + $0xc0] sm:$0xff]
    %v1180 = vld [vmem:[#allocation8 + $0xc8] sm:$0xff]
    %v1181 = vld [vmem:[#allocation8 + $0xd0] sm:$0xff]
    %v1182 = vld [vmem:[#allocation8 + $0xd8] sm:$0xff]
    %v1183 = vld [vmem:[#allocation8 + $0xe0] sm:$0xff]
    %v1184 = vld [vmem:[#allocation8 + $0xe8] sm:$0xff]
    %v1185 = vld [vmem:[#allocation8 + $0xf0] sm:$0xff]
    %v1186 = vld [vmem:[#allocation8 + $0xf8] sm:$0xff]
    %v1187 = vld [vmem:[%s6] sm:$0x3]
    %v1189 = vlaneseq
    %v1190 = vshrl.u32 %v1189, 7
    %v1191 = vsub.s32 0, %v1190
    %v1192 = vrot.slane %v1187, %v1191
    %v1193 = vlaneseq
    %v1194 = vshrl.u32 %v1193, 7
    %v1195 = vsub.s32 1, %v1194
    %v1196 = vrot.slane %v1187, %v1195
    %v1231 = vunpack.c.l.b16 %v1155
    %v1232 = vunpack.c.h.b16 %v1155
    %v1233 = vunpack.c.l.b16 %v1156
    %v1234 = vunpack.c.h.b16 %v1156
    %v1235 = vunpack.c.l.b16 %v1157
    %v1236 = vunpack.c.h.b16 %v1157
    %v1237 = vunpack.c.l.b16 %v1158
    %v1238 = vunpack.c.h.b16 %v1158
    %v1239 = vunpack.c.l.b16 %v1159
    %v1240 = vunpack.c.h.b16 %v1159
    %v1241 = vunpack.c.l.b16 %v1160
    %v1242 = vunpack.c.h.b16 %v1160
    %v1243 = vunpack.c.l.b16 %v1161
    %v1244 = vunpack.c.h.b16 %v1161
    %v1245 = vunpack.c.l.b16 %v1162
    %v1246 = vunpack.c.h.b16 %v1162
    %v1247 = vunpack.c.l.b16 %v1163
    %v1248 = vunpack.c.h.b16 %v1163
    %v1249 = vunpack.c.l.b16 %v1164
    %v1250 = vunpack.c.h.b16 %v1164
    %v1251 = vunpack.c.l.b16 %v1165
    %v1252 = vunpack.c.h.b16 %v1165
    %v1253 = vunpack.c.l.b16 %v1166
    %v1254 = vunpack.c.h.b16 %v1166
    %v1255 = vunpack.c.l.b16 %v1167
    %v1256 = vunpack.c.h.b16 %v1167
    %v1257 = vunpack.c.l.b16 %v1168
    %v1258 = vunpack.c.h.b16 %v1168
    %v1259 = vunpack.c.l.b16 %v1169
    %v1260 = vunpack.c.h.b16 %v1169
    %v1261 = vunpack.c.l.b16 %v1170
    %v1262 = vunpack.c.h.b16 %v1170
    %v1263 = vunpack.c.l.b16 %v1171
    %v1264 = vunpack.c.h.b16 %v1171
    %v1265 = vunpack.c.l.b16 %v1172
    %v1266 = vunpack.c.h.b16 %v1172
    %v1267 = vunpack.c.l.b16 %v1173
    %v1268 = vunpack.c.h.b16 %v1173
    %v1269 = vunpack.c.l.b16 %v1174
    %v1270 = vunpack.c.h.b16 %v1174
    %v1271 = vunpack.c.l.b16 %v1175
    %v1272 = vunpack.c.h.b16 %v1175
    %v1273 = vunpack.c.l.b16 %v1176
    %v1274 = vunpack.c.h.b16 %v1176
    %v1275 = vunpack.c.l.b16 %v1177
    %v1276 = vunpack.c.h.b16 %v1177
    %v1277 = vunpack.c.l.b16 %v1178
    %v1278 = vunpack.c.h.b16 %v1178
    %v1279 = vunpack.c.l.b16 %v1179
    %v1280 = vunpack.c.h.b16 %v1179
    %v1281 = vunpack.c.l.b16 %v1180
    %v1282 = vunpack.c.h.b16 %v1180
    %v1283 = vunpack.c.l.b16 %v1181
    %v1284 = vunpack.c.h.b16 %v1181
    %v1285 = vunpack.c.l.b16 %v1182
    %v1286 = vunpack.c.h.b16 %v1182
    %v1287 = vunpack.c.l.b16 %v1183
    %v1288 = vunpack.c.h.b16 %v1183
    %v1289 = vunpack.c.l.b16 %v1184
    %v1290 = vunpack.c.h.b16 %v1184
    %v1291 = vunpack.c.l.b16 %v1185
    %v1292 = vunpack.c.h.b16 %v1185
    %v1293 = vunpack.c.l.b16 %v1186
    %v1294 = vunpack.c.h.b16 %v1186
    %v1295 = vpack.c.b16 %v1233, %v1231
    %v1296 = vpack.c.b16 %v1234, %v1232
    %v1297 = vpack.c.b16 %v1237, %v1235
    %v1298 = vpack.c.b16 %v1238, %v1236
    %v1299 = vpack.c.b16 %v1241, %v1239
    %v1300 = vpack.c.b16 %v1242, %v1240
    %v1301 = vpack.c.b16 %v1245, %v1243
    %v1302 = vpack.c.b16 %v1246, %v1244
    %v1303 = vpack.c.b16 %v1249, %v1247
    %v1304 = vpack.c.b16 %v1250, %v1248
    %v1305 = vpack.c.b16 %v1253, %v1251
    %v1306 = vpack.c.b16 %v1254, %v1252
    %v1307 = vpack.c.b16 %v1257, %v1255
    %v1308 = vpack.c.b16 %v1258, %v1256
    %v1309 = vpack.c.b16 %v1261, %v1259
    %v1310 = vpack.c.b16 %v1262, %v1260
    %v1311 = vpack.c.b16 %v1265, %v1263
    %v1312 = vpack.c.b16 %v1266, %v1264
    %v1313 = vpack.c.b16 %v1269, %v1267
    %v1314 = vpack.c.b16 %v1270, %v1268
    %v1315 = vpack.c.b16 %v1273, %v1271
    %v1316 = vpack.c.b16 %v1274, %v1272
    %v1317 = vpack.c.b16 %v1277, %v1275
    %v1318 = vpack.c.b16 %v1278, %v1276
    %v1319 = vpack.c.b16 %v1281, %v1279
    %v1320 = vpack.c.b16 %v1282, %v1280
    %v1321 = vpack.c.b16 %v1285, %v1283
    %v1322 = vpack.c.b16 %v1286, %v1284
    %v1323 = vpack.c.b16 %v1289, %v1287
    %v1324 = vpack.c.b16 %v1290, %v1288
    %v1325 = vpack.c.b16 %v1293, %v1291
    %v1326 = vpack.c.b16 %v1294, %v1292
    %1359 = vmatprep.subr.bf16.mxu0 %v1296
    %1360 = vmatpush1.bf16.msra.mxu0 %v1295
    %1361 = vmatprep.subr.bf16.mxu0 %v1298
    %1362 = vmatpush1.bf16.msra.mxu0 %v1297
    %1363 = vmatprep.subr.bf16.mxu0 %v1300
    %1364 = vmatpush1.bf16.msra.mxu0 %v1299
    %1365 = vmatprep.subr.bf16.mxu0 %v1302
    %1366 = vmatpush1.bf16.msra.mxu0 %v1301
    %1367 = vmatprep.subr.bf16.mxu0 %v1304
    %1368 = vmatpush1.bf16.msra.mxu0 %v1303
    %1369 = vmatprep.subr.bf16.mxu0 %v1306
    %1370 = vmatpush1.bf16.msra.mxu0 %v1305
    %1371 = vmatprep.subr.bf16.mxu0 %v1308
    %1372 = vmatpush1.bf16.msra.mxu0 %v1307
    %1373 = vmatprep.subr.bf16.mxu0 %v1310
    %1374 = vmatpush1.bf16.msra.mxu0 %v1309
    %1375 = vmatprep.subr.bf16.mxu0 %v1312
    %1376 = vmatpush1.bf16.msra.mxu0 %v1311
    %1377 = vmatprep.subr.bf16.mxu0 %v1314
    %1378 = vmatpush1.bf16.msra.mxu0 %v1313
    %1379 = vmatprep.subr.bf16.mxu0 %v1316
    %1380 = vmatpush1.bf16.msra.mxu0 %v1315
    %1381 = vmatprep.subr.bf16.mxu0 %v1318
    %1382 = vmatpush1.bf16.msra.mxu0 %v1317
    %1383 = vmatprep.subr.bf16.mxu0 %v1320
    %1384 = vmatpush1.bf16.msra.mxu0 %v1319
    %1385 = vmatprep.subr.bf16.mxu0 %v1322
    %1386 = vmatpush1.bf16.msra.mxu0 %v1321
    %1387 = vmatprep.subr.bf16.mxu0 %v1324
    %1388 = vmatpush1.bf16.msra.mxu0 %v1323
    %1389 = vmatprep.subr.bf16.mxu0 %v1326
    %1390 = vmatpush1.bf16.msra.mxu0 %v1325
    %1391 = vmatprep.mubr.bf16.mxu0 %v1154
    %1392 = vmatmul.mubr.bf16.gmra.mrb[0].mxu0 %v1153
    %v1393 = vpop.f32.mrb[0].mxu0
    %v1394 = vadd.f32 %v1192, %v1393
    %v1395 = vpop.f32.mrb[0].mxu0
    %v1396 = vadd.f32 %v1196, %v1395
    %v1397 = vpop.f32.mrb[0].mxu0
    %v1398 = vpop.f32.mrb[0].mxu0
    %1399 = vdwg.mxu0
    %v1400 = vmax.f32 %v1394, 0.0
    %v1401 = vmax.f32 %v1396, 0.0
    %v1402 = vpack.c.bf16 %v1400, %v1400
    %v1403 = vpack.c.bf16 %v1401, %v1401
    %v1404 = vld [vmem:[#allocation10] sm:$0xff]
    %v1405 = vld [vmem:[#allocation10 + $0x8] sm:$0xff]
    %v1406 = vld [vmem:[#allocation10 + $0x10] sm:$0xff]
    %v1407 = vld [vmem:[#allocation10 + $0x18] sm:$0xff]
    %v1408 = vld [vmem:[#allocation10 + $0x20] sm:$0xff]
    %v1409 = vld [vmem:[#allocation10 + $0x28] sm:$0xff]
    %v1410 = vld [vmem:[#allocation10 + $0x30] sm:$0xff]
    %v1411 = vld [vmem:[#allocation10 + $0x38] sm:$0xff]
    %v1412 = vld [vmem:[#allocation10 + $0x40] sm:$0xff]
    %v1413 = vld [vmem:[#allocation10 + $0x48] sm:$0xff]
    %v1414 = vld [vmem:[#allocation10 + $0x50] sm:$0xff]
    %v1415 = vld [vmem:[#allocation10 + $0x58] sm:$0xff]
    %v1416 = vld [vmem:[#allocation10 + $0x60] sm:$0xff]
    %v1417 = vld [vmem:[#allocation10 + $0x68] sm:$0xff]
    %v1418 = vld [vmem:[#allocation10 + $0x70] sm:$0xff]
    %v1419 = vld [vmem:[#allocation10 + $0x78] sm:$0xff]
    %v1420 = vld [vmem:[#allocation10 + $0x80] sm:$0xff]
    %v1421 = vld [vmem:[#allocation10 + $0x88] sm:$0xff]
    %v1422 = vld [vmem:[#allocation10 + $0x90] sm:$0xff]
    %v1423 = vld [vmem:[#allocation10 + $0x98] sm:$0xff]
    %v1424 = vld [vmem:[#allocation10 + $0xa0] sm:$0xff]
    %v1425 = vld [vmem:[#allocation10 + $0xa8] sm:$0xff]
    %v1426 = vld [vmem:[#allocation10 + $0xb0] sm:$0xff]
    %v1427 = vld [vmem:[#allocation10 + $0xb8] sm:$0xff]
    %v1428 = vld [vmem:[#allocation10 + $0xc0] sm:$0xff]
    %v1429 = vld [vmem:[#allocation10 + $0xc8] sm:$0xff]
    %v1430 = vld [vmem:[#allocation10 + $0xd0] sm:$0xff]
    %v1431 = vld [vmem:[#allocation10 + $0xd8] sm:$0xff]
    %v1432 = vld [vmem:[#allocation10 + $0xe0] sm:$0xff]
    %v1433 = vld [vmem:[#allocation10 + $0xe8] sm:$0xff]
    %v1434 = vld [vmem:[#allocation10 + $0xf0] sm:$0xff]
    %v1435 = vld [vmem:[#allocation10 + $0xf8] sm:$0xff]
    %v1436 = vld [vmem:[%s8] sm:$0x3]
    %v1438 = vlaneseq
    %v1439 = vshrl.u32 %v1438, 7
    %v1440 = vsub.s32 0, %v1439
    %v1441 = vrot.slane %v1436, %v1440
    %v1442 = vlaneseq
    %v1443 = vshrl.u32 %v1442, 7
    %v1444 = vsub.s32 1, %v1443
    %v1445 = vrot.slane %v1436, %v1444
    %v1480 = vunpack.c.l.b16 %v1404
    %v1481 = vunpack.c.h.b16 %v1404
    %v1482 = vunpack.c.l.b16 %v1405
    %v1483 = vunpack.c.h.b16 %v1405
    %v1484 = vunpack.c.l.b16 %v1406
    %v1485 = vunpack.c.h.b16 %v1406
    %v1486 = vunpack.c.l.b16 %v1407
    %v1487 = vunpack.c.h.b16 %v1407
    %v1488 = vunpack.c.l.b16 %v1408
    %v1489 = vunpack.c.h.b16 %v1408
    %v1490 = vunpack.c.l.b16 %v1409
    %v1491 = vunpack.c.h.b16 %v1409
    %v1492 = vunpack.c.l.b16 %v1410
    %v1493 = vunpack.c.h.b16 %v1410
    %v1494 = vunpack.c.l.b16 %v1411
    %v1495 = vunpack.c.h.b16 %v1411
    %v1496 = vunpack.c.l.b16 %v1412
    %v1497 = vunpack.c.h.b16 %v1412
    %v1498 = vunpack.c.l.b16 %v1413
    %v1499 = vunpack.c.h.b16 %v1413
    %v1500 = vunpack.c.l.b16 %v1414
    %v1501 = vunpack.c.h.b16 %v1414
    %v1502 = vunpack.c.l.b16 %v1415
    %v1503 = vunpack.c.h.b16 %v1415
    %v1504 = vunpack.c.l.b16 %v1416
    %v1505 = vunpack.c.h.b16 %v1416
    %v1506 = vunpack.c.l.b16 %v1417
    %v1507 = vunpack.c.h.b16 %v1417
    %v1508 = vunpack.c.l.b16 %v1418
    %v1509 = vunpack.c.h.b16 %v1418
    %v1510 = vunpack.c.l.b16 %v1419
    %v1511 = vunpack.c.h.b16 %v1419
    %v1512 = vunpack.c.l.b16 %v1420
    %v1513 = vunpack.c.h.b16 %v1420
    %v1514 = vunpack.c.l.b16 %v1421
    %v1515 = vunpack.c.h.b16 %v1421
    %v1516 = vunpack.c.l.b16 %v1422
    %v1517 = vunpack.c.h.b16 %v1422
    %v1518 = vunpack.c.l.b16 %v1423
    %v1519 = vunpack.c.h.b16 %v1423
    %v1520 = vunpack.c.l.b16 %v1424
    %v1521 = vunpack.c.h.b16 %v1424
    %v1522 = vunpack.c.l.b16 %v1425
    %v1523 = vunpack.c.h.b16 %v1425
    %v1524 = vunpack.c.l.b16 %v1426
    %v1525 = vunpack.c.h.b16 %v1426
    %v1526 = vunpack.c.l.b16 %v1427
    %v1527 = vunpack.c.h.b16 %v1427
    %v1528 = vunpack.c.l.b16 %v1428
    %v1529 = vunpack.c.h.b16 %v1428
    %v1530 = vunpack.c.l.b16 %v1429
    %v1531 = vunpack.c.h.b16 %v1429
    %v1532 = vunpack.c.l.b16 %v1430
    %v1533 = vunpack.c.h.b16 %v1430
    %v1534 = vunpack.c.l.b16 %v1431
    %v1535 = vunpack.c.h.b16 %v1431
    %v1536 = vunpack.c.l.b16 %v1432
    %v1537 = vunpack.c.h.b16 %v1432
    %v1538 = vunpack.c.l.b16 %v1433
    %v1539 = vunpack.c.h.b16 %v1433
    %v1540 = vunpack.c.l.b16 %v1434
    %v1541 = vunpack.c.h.b16 %v1434
    %v1542 = vunpack.c.l.b16 %v1435
    %v1543 = vunpack.c.h.b16 %v1435
    %v1544 = vpack.c.b16 %v1482, %v1480
    %v1545 = vpack.c.b16 %v1483, %v1481
    %v1546 = vpack.c.b16 %v1486, %v1484
    %v1547 = vpack.c.b16 %v1487, %v1485
    %v1548 = vpack.c.b16 %v1490, %v1488
    %v1549 = vpack.c.b16 %v1491, %v1489
    %v1550 = vpack.c.b16 %v1494, %v1492
    %v1551 = vpack.c.b16 %v1495, %v1493
    %v1552 = vpack.c.b16 %v1498, %v1496
    %v1553 = vpack.c.b16 %v1499, %v1497
    %v1554 = vpack.c.b16 %v1502, %v1500
    %v1555 = vpack.c.b16 %v1503, %v1501
    %v1556 = vpack.c.b16 %v1506, %v1504
    %v1557 = vpack.c.b16 %v1507, %v1505
    %v1558 = vpack.c.b16 %v1510, %v1508
    %v1559 = vpack.c.b16 %v1511, %v1509
    %v1560 = vpack.c.b16 %v1514, %v1512
    %v1561 = vpack.c.b16 %v1515, %v1513
    %v1562 = vpack.c.b16 %v1518, %v1516
    %v1563 = vpack.c.b16 %v1519, %v1517
    %v1564 = vpack.c.b16 %v1522, %v1520
    %v1565 = vpack.c.b16 %v1523, %v1521
    %v1566 = vpack.c.b16 %v1526, %v1524
    %v1567 = vpack.c.b16 %v1527, %v1525
    %v1568 = vpack.c.b16 %v1530, %v1528
    %v1569 = vpack.c.b16 %v1531, %v1529
    %v1570 = vpack.c.b16 %v1534, %v1532
    %v1571 = vpack.c.b16 %v1535, %v1533
    %v1572 = vpack.c.b16 %v1538, %v1536
    %v1573 = vpack.c.b16 %v1539, %v1537
    %v1574 = vpack.c.b16 %v1542, %v1540
    %v1575 = vpack.c.b16 %v1543, %v1541
    %1608 = vmatprep.subr.bf16.mxu0 %v1545
    %1609 = vmatpush1.bf16.msra.mxu0 %v1544
    %1610 = vmatprep.subr.bf16.mxu0 %v1547
    %1611 = vmatpush1.bf16.msra.mxu0 %v1546
    %1612 = vmatprep.subr.bf16.mxu0 %v1549
    %1613 = vmatpush1.bf16.msra.mxu0 %v1548
    %1614 = vmatprep.subr.bf16.mxu0 %v1551
    %1615 = vmatpush1.bf16.msra.mxu0 %v1550
    %1616 = vmatprep.subr.bf16.mxu0 %v1553
    %1617 = vmatpush1.bf16.msra.mxu0 %v1552
    %1618 = vmatprep.subr.bf16.mxu0 %v1555
    %1619 = vmatpush1.bf16.msra.mxu0 %v1554
    %1620 = vmatprep.subr.bf16.mxu0 %v1557
    %1621 = vmatpush1.bf16.msra.mxu0 %v1556
    %1622 = vmatprep.subr.bf16.mxu0 %v1559
    %1623 = vmatpush1.bf16.msra.mxu0 %v1558
    %1624 = vmatprep.subr.bf16.mxu0 %v1561
    %1625 = vmatpush1.bf16.msra.mxu0 %v1560
    %1626 = vmatprep.subr.bf16.mxu0 %v1563
    %1627 = vmatpush1.bf16.msra.mxu0 %v1562
    %1628 = vmatprep.subr.bf16.mxu0 %v1565
    %1629 = vmatpush1.bf16.msra.mxu0 %v1564
    %1630 = vmatprep.subr.bf16.mxu0 %v1567
    %1631 = vmatpush1.bf16.msra.mxu0 %v1566
    %1632 = vmatprep.subr.bf16.mxu0 %v1569
    %1633 = vmatpush1.bf16.msra.mxu0 %v1568
    %1634 = vmatprep.subr.bf16.mxu0 %v1571
    %1635 = vmatpush1.bf16.msra.mxu0 %v1570
    %1636 = vmatprep.subr.bf16.mxu0 %v1573
    %1637 = vmatpush1.bf16.msra.mxu0 %v1572
    %1638 = vmatprep.subr.bf16.mxu0 %v1575
    %1639 = vmatpush1.bf16.msra.mxu0 %v1574
    %1640 = vmatprep.mubr.bf16.mxu0 %v1403
    %1641 = vmatmul.mubr.bf16.gmra.mrb[0].mxu0 %v1402
    %v1642 = vpop.f32.mrb[0].mxu0
    %v1643 = vadd.f32 %v1441, %v1642
    %v1644 = vpop.f32.mrb[0].mxu0
    %v1645 = vadd.f32 %v1445, %v1644
    %v1646 = vpop.f32.mrb[0].mxu0
    %v1647 = vpop.f32.mrb[0].mxu0
    %1648 = vdwg.mxu0
    %v1649 = vmax.f32 %v1643, 0.0
    %v1650 = vmax.f32 %v1645, 0.0
    %v1651 = vpack.c.bf16 %v1649, %v1649
    %v1652 = vpack.c.bf16 %v1650, %v1650
    %v1653 = vld [vmem:[#allocation11] sm:$0xf]
    %v1654 = vld [vmem:[#allocation11 + $0x4] sm:$0xf]
    %v1655 = vld [vmem:[#allocation11 + $0x8] sm:$0xf]
    %v1656 = vld [vmem:[#allocation11 + $0xc] sm:$0xf]
    %v1657 = vld [vmem:[#allocation11 + $0x10] sm:$0xf]
    %v1658 = vld [vmem:[#allocation11 + $0x14] sm:$0xf]
    %v1659 = vld [vmem:[#allocation11 + $0x18] sm:$0xf]
    %v1660 = vld [vmem:[#allocation11 + $0x1c] sm:$0xf]
    %v1661 = vld [vmem:[#allocation11 + $0x20] sm:$0xf]
    %v1662 = vld [vmem:[#allocation11 + $0x24] sm:$0xf]
    %v1663 = vld [vmem:[#allocation11 + $0x28] sm:$0xf]
    %v1664 = vld [vmem:[#allocation11 + $0x2c] sm:$0xf]
    %v1665 = vld [vmem:[#allocation11 + $0x30] sm:$0xf]
    %v1666 = vld [vmem:[#allocation11 + $0x34] sm:$0xf]
    %v1667 = vld [vmem:[#allocation11 + $0x38] sm:$0xf]
    %v1668 = vld [vmem:[#allocation11 + $0x3c] sm:$0xf]
    %v1669 = vld [vmem:[#allocation11 + $0x40] sm:$0xf]
    %v1670 = vld [vmem:[#allocation11 + $0x44] sm:$0xf]
    %v1671 = vld [vmem:[#allocation11 + $0x48] sm:$0xf]
    %v1672 = vld [vmem:[#allocation11 + $0x4c] sm:$0xf]
    %v1673 = vld [vmem:[#allocation11 + $0x50] sm:$0xf]
    %v1674 = vld [vmem:[#allocation11 + $0x54] sm:$0xf]
    %v1675 = vld [vmem:[#allocation11 + $0x58] sm:$0xf]
    %v1676 = vld [vmem:[#allocation11 + $0x5c] sm:$0xf]
    %v1677 = vld [vmem:[#allocation11 + $0x60] sm:$0xf]
    %v1678 = vld [vmem:[#allocation11 + $0x64] sm:$0xf]
    %v1679 = vld [vmem:[#allocation11 + $0x68] sm:$0xf]
    %v1680 = vld [vmem:[#allocation11 + $0x6c] sm:$0xf]
    %v1681 = vld [vmem:[#allocation11 + $0x70] sm:$0xf]
    %v1682 = vld [vmem:[#allocation11 + $0x74] sm:$0xf]
    %v1683 = vld [vmem:[#allocation11 + $0x78] sm:$0xf]
    %v1684 = vld [vmem:[#allocation11 + $0x7c] sm:$0xf]
    %v1685 = vld [vmem:[%s10] sm:$0x1]
    %v1687 = vlaneseq
    %v1688 = vshrl.u32 %v1687, 7
    %v1689 = vsub.s32 0, %v1688
    %v1690 = vrot.slane %v1685, %v1689
    %v1724 = vunpack.c.l.b16 %v1653
    %v1725 = vunpack.c.l.b16 %v1654
    %v1726 = vunpack.c.l.b16 %v1655
    %v1727 = vunpack.c.l.b16 %v1656
    %v1728 = vunpack.c.l.b16 %v1657
    %v1729 = vunpack.c.l.b16 %v1658
    %v1730 = vunpack.c.l.b16 %v1659
    %v1731 = vunpack.c.l.b16 %v1660
    %v1732 = vunpack.c.l.b16 %v1661
    %v1733 = vunpack.c.l.b16 %v1662
    %v1734 = vunpack.c.l.b16 %v1663
    %v1735 = vunpack.c.l.b16 %v1664
    %v1736 = vunpack.c.l.b16 %v1665
    %v1737 = vunpack.c.l.b16 %v1666
    %v1738 = vunpack.c.l.b16 %v1667
    %v1739 = vunpack.c.l.b16 %v1668
    %v1740 = vunpack.c.l.b16 %v1669
    %v1741 = vunpack.c.l.b16 %v1670
    %v1742 = vunpack.c.l.b16 %v1671
    %v1743 = vunpack.c.l.b16 %v1672
    %v1744 = vunpack.c.l.b16 %v1673
    %v1745 = vunpack.c.l.b16 %v1674
    %v1746 = vunpack.c.l.b16 %v1675
    %v1747 = vunpack.c.l.b16 %v1676
    %v1748 = vunpack.c.l.b16 %v1677
    %v1749 = vunpack.c.l.b16 %v1678
    %v1750 = vunpack.c.l.b16 %v1679
    %v1751 = vunpack.c.l.b16 %v1680
    %v1752 = vunpack.c.l.b16 %v1681
    %v1753 = vunpack.c.l.b16 %v1682
    %v1754 = vunpack.c.l.b16 %v1683
    %v1755 = vunpack.c.l.b16 %v1684
    %v1756 = vpack.c.b16 %v1725, %v1724
    %v1757 = vpack.c.b16 %v1727, %v1726
    %v1758 = vpack.c.b16 %v1729, %v1728
    %v1759 = vpack.c.b16 %v1731, %v1730
    %v1760 = vpack.c.b16 %v1733, %v1732
    %v1761 = vpack.c.b16 %v1735, %v1734
    %v1762 = vpack.c.b16 %v1737, %v1736
    %v1763 = vpack.c.b16 %v1739, %v1738
    %v1764 = vpack.c.b16 %v1741, %v1740
    %v1765 = vpack.c.b16 %v1743, %v1742
    %v1766 = vpack.c.b16 %v1745, %v1744
    %v1767 = vpack.c.b16 %v1747, %v1746
    %v1768 = vpack.c.b16 %v1749, %v1748
    %v1769 = vpack.c.b16 %v1751, %v1750
    %v1770 = vpack.c.b16 %v1753, %v1752
    %v1771 = vpack.c.b16 %v1755, %v1754
    %1788 = vmatprep.subr.bf16.mxu0 0
    %1789 = vmatpush1.bf16.msra.mxu0 %v1756
    %1790 = vmatprep.subr.bf16.mxu0 0
    %1791 = vmatpush1.bf16.msra.mxu0 %v1757
    %1792 = vmatprep.subr.bf16.mxu0 0
    %1793 = vmatpush1.bf16.msra.mxu0 %v1758
    %1794 = vmatprep.subr.bf16.mxu0 0
    %1795 = vmatpush1.bf16.msra.mxu0 %v1759
    %1796 = vmatprep.subr.bf16.mxu0 0
    %1797 = vmatpush1.bf16.msra.mxu0 %v1760
    %1798 = vmatprep.subr.bf16.mxu0 0
    %1799 = vmatpush1.bf16.msra.mxu0 %v1761
    %1800 = vmatprep.subr.bf16.mxu0 0
    %1801 = vmatpush1.bf16.msra.mxu0 %v1762
    %1802 = vmatprep.subr.bf16.mxu0 0
    %1803 = vmatpush1.bf16.msra.mxu0 %v1763
    %1804 = vmatprep.subr.bf16.mxu0 0
    %1805 = vmatpush1.bf16.msra.mxu0 %v1764
    %1806 = vmatprep.subr.bf16.mxu0 0
    %1807 = vmatpush1.bf16.msra.mxu0 %v1765
    %1808 = vmatprep.subr.bf16.mxu0 0
    %1809 = vmatpush1.bf16.msra.mxu0 %v1766
    %1810 = vmatprep.subr.bf16.mxu0 0
    %1811 = vmatpush1.bf16.msra.mxu0 %v1767
    %1812 = vmatprep.subr.bf16.mxu0 0
    %1813 = vmatpush1.bf16.msra.mxu0 %v1768
    %1814 = vmatprep.subr.bf16.mxu0 0
    %1815 = vmatpush1.bf16.msra.mxu0 %v1769
    %1816 = vmatprep.subr.bf16.mxu0 0
    %1817 = vmatpush1.bf16.msra.mxu0 %v1770
    %1818 = vmatprep.subr.bf16.mxu0 0
    %1819 = vmatpush1.bf16.msra.mxu0 %v1771
    %1820 = vmatprep.mubr.bf16.mxu0 %v1652
    %1821 = vmatmul.mubr.bf16.gmra.mrb[0].mxu0 %v1651
    %v1822 = vpop.f32.mrb[0].mxu0
    %v1823 = vadd.f32 %v1690, %v1822
    %v1824 = vpop.f32.mrb[0].mxu0
    %v1825 = vpop.f32.mrb[0].mxu0
    %v1826 = vpop.f32.mrb[0].mxu0
    %1827 = vdwg.mxu0
    %1828 = vmax.xlane.f32.xlu0 %v1823
    %v1829 = vpop.xlane.xlu0 %1828
    %v1830 = vsub.f32 %v1823, %v1829
    %v1831 = vmul.f32 %v1830, 1.442695
    %v1832 = vpow.pop %v1831
    %1833 = vadd.xlane.f32.xlu0 %v1832
    %v1834 = vpop.xlane.xlu0 %1833
    %v1835 = vrcp.pop %v1834
    %v1836 = vmul.f32 %v1832, %v1835
    %1837 = vst [vmem:[#allocation13] sm:$0xff] %v1836
    // Predicated region
    $region70: #{tpu_custom_call.1} parent=1 // pred_check
      _
    $region71: #{tpu_custom_call.1} parent=1 // pred_check_branch
      %1839 = sbr.rel (0) target = $region73
    $region72: #{tpu_custom_call.1} parent=1 // pred_region
      %s1841 = ssub.s32 128, 128
      %1842 = vsyncadd [#allocation4], %s1841
      %s1844 = sshll.u32 [#allocation13], 4
      %s1845 = int_to_ptr.vmem [resolvable:$true] %s1844
      %1847 = dma.vmem_to_hbm [thread:$0]  %s1845, 128, %s11, [#allocation4]
    $region73: #{tpu_custom_call.1} parent=1 // pred_fallthru
      _
    // Predicated region
    $region74: #{tpu_custom_call.1} parent=1 // pred_check
      _
    $region75: #{tpu_custom_call.1} parent=1 // pred_check_branch
      %1849 = sbr.rel (0) target = $region77
    $region76: #{tpu_custom_call.1} parent=1 // pred_region
      %1850 = dma.done [#allocation4], 128
    $region77: #{tpu_custom_call.1} parent=1 // pred_fallthru
      _
    %1851 = vsyncpa [#allocation3], 1
    %1852 = vsyncpa [#allocation6], 1
    %1853 = vsyncpa [#allocation9], 1
    %1854 = vsyncpa [#allocation12], 1
    %1855 = vsyncpa [#allocation4], 1

</llo_original>
